<compile_context>
chip_gen: v7x
topology: tpu7x:2x2x1
jax: 0.10.0
libtpu: 0.0.40
codegen_flags: <defaults>
</compile_context>

<pallas_src>
import functools

import jax
import jax.numpy as jnp
from jax import lax
from jax.experimental import pallas as pl
from jax.experimental.pallas import tpu as pltpu


_LANES = 128                 # lane (last-dim) tile width
_ACC_ROWS = 16               # rows per compute chunk (1 packed bf16 / 2 f32 vregs)
_INNER_UNROLL = 8            # static unroll of the chunk loop body
_MACRO_ROWS = _ACC_ROWS * _INNER_UNROLL     # 128 rows per fori_loop trip
_NUM_CORE_SPLITS = 2         # leading "parallel" grid axis (2 TCs on v7x)
_N_MOMENTS = 5               # sum_p, sum_t, sum_pp, sum_tt, sum_pt


def _round_up(x, m):
    return ((x + m - 1) // m) * m


def _ccc_moments_kernel(shift_ref, p_ref, t_ref, o_ref, *,
                        block_rows, rows_total, blocks_per_core):
    """Accumulate shift-centred raw moments of one (block_rows, 128) tile.

    shift_ref : SMEM (2,) f32                       [shift_p, shift_t]
    p_ref     : VMEM (block_rows, 128) native dtype
    t_ref     : VMEM (block_rows, 128) native dtype
    o_ref     : VMEM (5, 16, 128) f32  per-core-split running moments; stays
                resident across the inner ("arbitrary") grid axis and is
                reduced to 5 scalars in the JAX wrapper.
    """
    c = pl.program_id(0)
    i = pl.program_id(1)

    @pl.when(i == 0)
    def _init():
        o_ref[...] = jnp.zeros_like(o_ref)

    # Rows of this block that hold real data, derived from the GLOBAL row
    # index so garbage from Pallas's ragged-last-block padding and from the
    # second core split's overshoot blocks can never leak into the moments.
    start_row = (c * blocks_per_core + i) * block_rows
    valid = jnp.clip(rows_total - start_row, 0, block_rows)

    shift_p = shift_ref[0]
    shift_t = shift_ref[1]
    # Hoisted once per tile (JAX does not CSE broadcast_in_dim inside loops).
    shift_p_v = jnp.full((_ACC_ROWS, _LANES), shift_p, jnp.float32)
    shift_t_v = jnp.full((_ACC_ROWS, _LANES), shift_t, jnp.float32)

    n_macro = block_rows // _MACRO_ROWS

    def accumulate(masked):
        def body(k, accs):
            s_p, s_t, s_pp, s_tt, s_pt = accs
            r0 = pl.multiple_of(k * _MACRO_ROWS, _MACRO_ROWS)
            for j in range(_INNER_UNROLL):          # static unroll
                r = r0 + j * _ACC_ROWS
                p = p_ref[pl.ds(r, _ACC_ROWS), :].astype(jnp.float32) - shift_p_v
                t = t_ref[pl.ds(r, _ACC_ROWS), :].astype(jnp.float32) - shift_t_v
                if masked:
                    row = r + lax.broadcasted_iota(
                        jnp.int32, (_ACC_ROWS, _LANES), 0)
                    keep = row < valid
                    p = jnp.where(keep, p, 0.0)
                    t = jnp.where(keep, t, 0.0)
                s_p = s_p + p
                s_t = s_t + t
                s_pp = s_pp + p * p
                s_tt = s_tt + t * t
                s_pt = s_pt + p * t
            return (s_p, s_t, s_pp, s_tt, s_pt)

        zero = jnp.zeros((_ACC_ROWS, _LANES), jnp.float32)
        accs = lax.fori_loop(0, n_macro, body, (zero, zero, zero, zero, zero))
        for k in range(_N_MOMENTS):
            o_ref[k] = o_ref[k] + accs[k]

    @pl.when(valid == block_rows)
    def _full():
        accumulate(masked=False)        # fast path: no per-element selects

    @pl.when(jnp.logical_and(valid > 0, valid < block_rows))
    def _ragged():
        accumulate(masked=True)         # only the ragged block pays the mask


def ccc_loss(preds, targets, reduction="mean", block_rows=None):
    """Pallas equivalent of CCCLoss.forward(preds, targets)."""
    # torch's preds.float().squeeze(-1): drop the last dim only when it is 1.
    if preds.ndim > 0 and preds.shape[-1] == 1:
        preds = jnp.squeeze(preds, axis=-1)

    if preds.size != targets.size:
        raise ValueError(
            f"CCCLoss: preds {preds.shape} and targets {targets.shape} must "
            "contain the same number of elements.")
    if preds.size == 0:
        raise ValueError("CCCLoss: empty inputs are not supported.")

    n_true = int(preds.size)
    p_flat = preds.reshape(-1)          # native dtype on the wire
    t_flat = targets.reshape(-1)

    # Cheap scalar shifts (first element of each stream); also used as the
    # padding value so the <=127 padded tail elements contribute exactly 0.
    shift_p = p_flat[0]
    shift_t = t_flat[0]
    shifts = jnp.stack([shift_p.astype(jnp.float32),
                        shift_t.astype(jnp.float32)])

    # Pad only to lane (128) granularity — and only when N is not already
    # lane-divisible (the common aligned case is completely copy-free).
    pad = (-n_true) % _LANES
    if pad:
        p_flat = jnp.concatenate(
            [p_flat, jnp.full((pad,), shift_p, dtype=p_flat.dtype)])
        t_flat = jnp.concatenate(
            [t_flat, jnp.full((pad,), shift_t, dtype=t_flat.dtype)])
    rows = (n_true + pad) // _LANES

    p2 = p_flat.reshape(rows, _LANES)   # free reshape when pad == 0
    t2 = t_flat.reshape(rows, _LANES)

    # dtype-aware block size: ~1 MiB per input block (2 inputs x 2 pipeline
    # buffers fits every generation's default scoped VMEM).
    max_itemsize = max(p2.dtype.itemsize, t2.dtype.itemsize)
    max_rows = 2048 if max_itemsize >= 4 else 4096
    if block_rows is None:
        block_rows = min(max_rows, _round_up(rows, _MACRO_ROWS))
    elif block_rows <= 0 or block_rows % _MACRO_ROWS != 0:
        raise ValueError(
            f"block_rows must be a positive multiple of {_MACRO_ROWS}, "
            f"got {block_rows}")

    total_blocks = -(-rows // block_rows)
    blocks_per_core = -(-total_blocks // _NUM_CORE_SPLITS)
    grid = (_NUM_CORE_SPLITS, blocks_per_core)
    last_block = total_blocks - 1

    def block_map(c, i):
        # Clamp so overshoot (c, i) pairs never address past the array; their
        # contribution is skipped in-kernel via the global-row validity test.
        return (jnp.minimum(c * blocks_per_core + i, last_block), 0)

    kernel = functools.partial(
        _ccc_moments_kernel,
        block_rows=block_rows,
        rows_total=rows,
        blocks_per_core=blocks_per_core)

    out_elems = _NUM_CORE_SPLITS * _N_MOMENTS * _ACC_ROWS * _LANES
    bytes_accessed = (p2.size * p2.dtype.itemsize
                      + t2.size * t2.dtype.itemsize
                      + out_elems * 4 + 8)

    moments = pl.pallas_call(
        kernel,
        out_shape=jax.ShapeDtypeStruct(
            (_NUM_CORE_SPLITS * _N_MOMENTS, _ACC_ROWS, _LANES), jnp.float32),
        grid_spec=pltpu.PrefetchScalarGridSpec(
            num_scalar_prefetch=0,
            grid=grid,
            in_specs=[
                pl.BlockSpec(memory_space=pltpu.MemorySpace.SMEM),   # shifts
                pl.BlockSpec((block_rows, _LANES), block_map),       # preds
                pl.BlockSpec((block_rows, _LANES), block_map),       # targets
            ],
            out_specs=pl.BlockSpec((_N_MOMENTS, _ACC_ROWS, _LANES),
                                   lambda c, i: (c, 0, 0)),
        ),
        compiler_params=pltpu.CompilerParams(
            dimension_semantics=("parallel", "arbitrary")),
        cost_estimate=pl.CostEstimate(
            flops=10 * n_true, transcendentals=0,
            bytes_accessed=bytes_accessed),
    )(shifts, p2, t2)

    # Tiny JAX epilogue: combine per-core-split partial moments and apply the
    # CCC formula (population statistics == torch var(unbiased=False)).
    m = moments.reshape(_NUM_CORE_SPLITS, _N_MOMENTS, _ACC_ROWS, _LANES)
    s = jnp.sum(m, axis=(0, 2, 3), dtype=jnp.float32)    # (5,)
    n = jnp.float32(n_true)
    s_p, s_t, s_pp, s_tt, s_pt = s[0], s[1], s[2], s[3], s[4]

    pm_s = s_p / n                       # mean of shifted preds
    tm_s = s_t / n                       # mean of shifted targets
    pred_var = s_pp / n - pm_s * pm_s    # shift-invariant (ddof=0)
    target_var = s_tt / n - tm_s * tm_s
    cov = s_pt / n - pm_s * tm_s
    mean_diff = (pm_s + shifts[0]) - (tm_s + shifts[1])

    ccc = 2.0 * cov / (pred_var + target_var + mean_diff * mean_diff + 1e-8)
    loss = 1.0 - ccc
    # Loss is a scalar, so 'mean' / 'sum' reductions are identities
    # (matches torch: loss.mean() == loss.sum() == loss for a 0-d tensor).
    if reduction in ("mean", "sum"):
        return loss
    return loss


def _ccc_loss_ref(preds, targets):
    """Pure-JAX reference mirroring the PyTorch module, for verification."""
    p = preds.astype(jnp.float32)
    if p.ndim > 0 and p.shape[-1] == 1:
        p = jnp.squeeze(p, -1)
    t = targets.astype(jnp.float32)
    pm, tm = jnp.mean(p), jnp.mean(t)
    pv, tv = jnp.var(p), jnp.var(t)
    cov = jnp.mean((p - pm) * (t - tm))
    ccc = 2 * cov / (pv + tv + (pm - tm) ** 2 + 1e-8)
    return 1.0 - ccc


if __name__ == "__main__":
    key = jax.random.PRNGKey(0)
    k1, k2, k3, k4, k5, k6, k7, k8 = jax.random.split(key, 8)

    # Case 1: shapes implied by the module (model emits (B, S, 1), labels (B, S)).
    B, S = 2, 8
    preds1 = jax.random.normal(k1, (B, S, 1), dtype=jnp.float32)
    targets1 = jax.random.normal(k2, (B, S), dtype=jnp.float32)
    loss1 = jax.block_until_ready(ccc_loss(preds1, targets1, reduction="mean"))
    ref1 = _ccc_loss_ref(preds1, targets1)
    assert jnp.allclose(loss1, ref1, atol=1e-5, rtol=1e-5), (loss1, ref1)

    # Case 2: multi-block grid spanning both core splits + ragged (masked) last
    # block + non-128-divisible N + non-zero mean.
    preds2 = jax.random.normal(k3, (16, 3001, 1), dtype=jnp.float32) * 0.3 + 5.0
    targets2 = jax.random.normal(k4, (16, 3001), dtype=jnp.float32) * 0.3 + 5.0
    loss2 = jax.block_until_ready(ccc_loss(preds2, targets2, block_rows=128))
    ref2 = _ccc_loss_ref(preds2, targets2)
    assert jnp.allclose(loss2, ref2, atol=1e-4, rtol=1e-4), (loss2, ref2)

    # Case 3: bf16 stays bf16 on the wire; per-chunk cast + odd tail in-kernel.
    preds3 = jax.random.normal(k5, (3, 257, 1), dtype=jnp.float32).astype(jnp.bfloat16)
    targets3 = jax.random.normal(k6, (3, 257), dtype=jnp.float32).astype(jnp.bfloat16)
    loss3 = jax.block_until_ready(ccc_loss(preds3, targets3))
    ref3 = _ccc_loss_ref(preds3, targets3)
    assert jnp.allclose(loss3, ref3, atol=1e-3, rtol=1e-3), (loss3, ref3)

    # Case 4: 128-divisible N -> fully copy-free wrapper path (no padding).
    preds4 = jax.random.normal(k7, (4, 512, 1), dtype=jnp.float32)
    targets4 = jax.random.normal(k8, (4, 512), dtype=jnp.float32)
    loss4 = jax.block_until_ready(ccc_loss(preds4, targets4))
    ref4 = _ccc_loss_ref(preds4, targets4)
    assert jnp.allclose(loss4, ref4, atol=1e-5, rtol=1e-5), (loss4, ref4)

    print("KERNEL_OK")
</pallas_src>

<mosaic_0001>
module attributes {stable_mosaic.version = 11 : i64} {
  func.func @_ccc_moments_kernel(%arg0: i32, %arg1: i32, %arg2: memref<2xf32, #tpu.memory_space<smem>>, %arg3: memref<128x128xf32, #tpu.memory_space<vmem>>, %arg4: memref<128x128xf32, #tpu.memory_space<vmem>>, %arg5: memref<5x16x128xf32, #tpu.memory_space<vmem>>) attributes {dimension_semantics = [#tpu.dimension_semantics<parallel>, #tpu.dimension_semantics<arbitrary>], iteration_bounds = array<i64: 2, 1>, scalar_prefetch = 0 : i64, scratch_operands = 0 : i64, tpu.core_type = #tpu.core_type<tc>, window_params = [{transform_indices = @transform_0, window_bounds = array<i64: 2>}, {transform_indices = @transform_1, window_bounds = array<i64: 128, 128>}, {transform_indices = @transform_2, window_bounds = array<i64: 128, 128>}, {transform_indices = @transform_3, window_bounds = array<i64: 5, 16, 128>}]} {
    %c0_i32 = arith.constant 0 : i32
    %0 = arith.cmpi eq, %arg1, %c0_i32 : i32
    %1 = arith.extui %0 : i1 to i32
    %c0_i32_0 = arith.constant 0 : i32
    %2 = arith.cmpi ne, %1, %c0_i32_0 : i32
    scf.if %2 {
      %cst = arith.constant 0.000000e+00 : f32
      %21 = vector.broadcast %cst : f32 to vector<5x16x128xf32>
      %c0_9 = arith.constant 0 : index
      %c0_10 = arith.constant 0 : index
      %c0_11 = arith.constant 0 : index
      %22 = vector.load %arg5[%c0_9, %c0_10, %c0_11] : memref<5x16x128xf32, #tpu.memory_space<vmem>>, vector<5x16x128xf32>
      tpu.vector_store %arg5[%c0_9, %c0_10, %c0_11], %21 {strides = array<i32>} : memref<5x16x128xf32, #tpu.memory_space<vmem>>, vector<5x16x128xf32>,
    } else {
    }
    %c1_i32 = arith.constant 1 : i32
    %3 = arith.muli %arg0, %c1_i32 : i32
    %4 = arith.addi %3, %arg1 : i32
    %c128_i32 = arith.constant 128 : i32
    %5 = arith.muli %4, %c128_i32 : i32
    %c1_i32_1 = arith.constant 1 : i32
    %6 = arith.subi %c1_i32_1, %5 : i32
    %c0_i32_2 = arith.constant 0 : i32
    %c128_i32_3 = arith.constant 128 : i32
    %7 = arith.maxsi %c0_i32_2, %6 : i32
    %8 = arith.minsi %c128_i32_3, %7 : i32
    %c0 = arith.constant 0 : index
    %9 = memref.load %arg2[%c0] : memref<2xf32, #tpu.memory_space<smem>>
    %c1 = arith.constant 1 : index
    %10 = memref.load %arg2[%c1] : memref<2xf32, #tpu.memory_space<smem>>
    %11 = vector.broadcast %9 : f32 to vector<16x128xf32>
    %12 = vector.broadcast %10 : f32 to vector<16x128xf32>
    %c128_i32_4 = arith.constant 128 : i32
    %13 = arith.cmpi eq, %8, %c128_i32_4 : i32
    %14 = arith.extui %13 : i1 to i32
    %c0_i32_5 = arith.constant 0 : i32
    %15 = arith.cmpi ne, %14, %c0_i32_5 : i32
    scf.if %15 {
      %cst = arith.constant 0.000000e+00 : f32
      %21 = vector.broadcast %cst : f32 to vector<16x128xf32>
      %c0_i32_9 = arith.constant 0 : i32
      %c128_i32_10 = arith.constant 128 : i32
      %22 = arith.muli %c0_i32_9, %c128_i32_10 : i32
      %23 = tpu.assume_multiple %22, 128 : i32
      %c0_i32_11 = arith.constant 0 : i32
      %24 = arith.addi %23, %c0_i32_11 : i32
      %25 = arith.index_cast %24 : i32 to index
      %c0_12 = arith.constant 0 : index
      %26 = vector.load %arg3[%25, %c0_12] : memref<128x128xf32, #tpu.memory_space<vmem>>, vector<16x128xf32>
      %27 = arith.subf %26, %11 : vector<16x128xf32>
      %28 = arith.index_cast %24 : i32 to index
      %c0_13 = arith.constant 0 : index
      %29 = vector.load %arg4[%28, %c0_13] : memref<128x128xf32, #tpu.memory_space<vmem>>, vector<16x128xf32>
      %30 = arith.subf %29, %12 : vector<16x128xf32>
      %31 = arith.addf %21, %27 : vector<16x128xf32>
      %32 = arith.addf %21, %30 : vector<16x128xf32>
      %33 = arith.mulf %27, %27 : vector<16x128xf32>
      %34 = arith.addf %21, %33 : vector<16x128xf32>
      %35 = arith.mulf %30, %30 : vector<16x128xf32>
      %36 = arith.addf %21, %35 : vector<16x128xf32>
      %37 = arith.mulf %27, %30 : vector<16x128xf32>
      %38 = arith.addf %21, %37 : vector<16x128xf32>
      %c16_i32 = arith.constant 16 : i32
      %39 = arith.addi %23, %c16_i32 : i32
      %40 = arith.index_cast %39 : i32 to index
      %c0_14 = arith.constant 0 : index
      %41 = vector.load %arg3[%40, %c0_14] : memref<128x128xf32, #tpu.memory_space<vmem>>, vector<16x128xf32>
      %42 = arith.subf %41, %11 : vector<16x128xf32>
      %43 = arith.index_cast %39 : i32 to index
      %c0_15 = arith.constant 0 : index
      %44 = vector.load %arg4[%43, %c0_15] : memref<128x128xf32, #tpu.memory_space<vmem>>, vector<16x128xf32>
      %45 = arith.subf %44, %12 : vector<16x128xf32>
      %46 = arith.addf %31, %42 : vector<16x128xf32>
      %47 = arith.addf %32, %45 : vector<16x128xf32>
      %48 = arith.mulf %42, %42 : vector<16x128xf32>
      %49 = arith.addf %34, %48 : vector<16x128xf32>
      %50 = arith.mulf %45, %45 : vector<16x128xf32>
      %51 = arith.addf %36, %50 : vector<16x128xf32>
      %52 = arith.mulf %42, %45 : vector<16x128xf32>
      %53 = arith.addf %38, %52 : vector<16x128xf32>
      %c32_i32 = arith.constant 32 : i32
      %54 = arith.addi %23, %c32_i32 : i32
      %55 = arith.index_cast %54 : i32 to index
      %c0_16 = arith.constant 0 : index
      %56 = vector.load %arg3[%55, %c0_16] : memref<128x128xf32, #tpu.memory_space<vmem>>, vector<16x128xf32>
      %57 = arith.subf %56, %11 : vector<16x128xf32>
      %58 = arith.index_cast %54 : i32 to index
      %c0_17 = arith.constant 0 : index
      %59 = vector.load %arg4[%58, %c0_17] : memref<128x128xf32, #tpu.memory_space<vmem>>, vector<16x128xf32>
      %60 = arith.subf %59, %12 : vector<16x128xf32>
      %61 = arith.addf %46, %57 : vector<16x128xf32>
      %62 = arith.addf %47, %60 : vector<16x128xf32>
      %63 = arith.mulf %57, %57 : vector<16x128xf32>
      %64 = arith.addf %49, %63 : vector<16x128xf32>
      %65 = arith.mulf %60, %60 : vector<16x128xf32>
      %66 = arith.addf %51, %65 : vector<16x128xf32>
      %67 = arith.mulf %57, %60 : vector<16x128xf32>
      %68 = arith.addf %53, %67 : vector<16x128xf32>
      %c48_i32 = arith.constant 48 : i32
      %69 = arith.addi %23, %c48_i32 : i32
      %70 = arith.index_cast %69 : i32 to index
      %c0_18 = arith.constant 0 : index
      %71 = vector.load %arg3[%70, %c0_18] : memref<128x128xf32, #tpu.memory_space<vmem>>, vector<16x128xf32>
      %72 = arith.subf %71, %11 : vector<16x128xf32>
      %73 = arith.index_cast %69 : i32 to index
      %c0_19 = arith.constant 0 : index
      %74 = vector.load %arg4[%73, %c0_19] : memref<128x128xf32, #tpu.memory_space<vmem>>, vector<16x128xf32>
      %75 = arith.subf %74, %12 : vector<16x128xf32>
      %76 = arith.addf %61, %72 : vector<16x128xf32>
      %77 = arith.addf %62, %75 : vector<16x128xf32>
      %78 = arith.mulf %72, %72 : vector<16x128xf32>
      %79 = arith.addf %64, %78 : vector<16x128xf32>
      %80 = arith.mulf %75, %75 : vector<16x128xf32>
      %81 = arith.addf %66, %80 : vector<16x128xf32>
      %82 = arith.mulf %72, %75 : vector<16x128xf32>
      %83 = arith.addf %68, %82 : vector<16x128xf32>
      %c64_i32 = arith.constant 64 : i32
      %84 = arith.addi %23, %c64_i32 : i32
      %85 = arith.index_cast %84 : i32 to index
      %c0_20 = arith.constant 0 : index
      %86 = vector.load %arg3[%85, %c0_20] : memref<128x128xf32, #tpu.memory_space<vmem>>, vector<16x128xf32>
      %87 = arith.subf %86, %11 : vector<16x128xf32>
      %88 = arith.index_cast %84 : i32 to index
      %c0_21 = arith.constant 0 : index
      %89 = vector.load %arg4[%88, %c0_21] : memref<128x128xf32, #tpu.memory_space<vmem>>, vector<16x128xf32>
      %90 = arith.subf %89, %12 : vector<16x128xf32>
      %91 = arith.addf %76, %87 : vector<16x128xf32>
      %92 = arith.addf %77, %90 : vector<16x128xf32>
      %93 = arith.mulf %87, %87 : vector<16x128xf32>
      %94 = arith.addf %79, %93 : vector<16x128xf32>
      %95 = arith.mulf %90, %90 : vector<16x128xf32>
      %96 = arith.addf %81, %95 : vector<16x128xf32>
      %97 = arith.mulf %87, %90 : vector<16x128xf32>
      %98 = arith.addf %83, %97 : vector<16x128xf32>
      %c80_i32 = arith.constant 80 : i32
      %99 = arith.addi %23, %c80_i32 : i32
      %100 = arith.index_cast %99 : i32 to index
      %c0_22 = arith.constant 0 : index
      %101 = vector.load %arg3[%100, %c0_22] : memref<128x128xf32, #tpu.memory_space<vmem>>, vector<16x128xf32>
      %102 = arith.subf %101, %11 : vector<16x128xf32>
      %103 = arith.index_cast %99 : i32 to index
      %c0_23 = arith.constant 0 : index
      %104 = vector.load %arg4[%103, %c0_23] : memref<128x128xf32, #tpu.memory_space<vmem>>, vector<16x128xf32>
      %105 = arith.subf %104, %12 : vector<16x128xf32>
      %106 = arith.addf %91, %102 : vector<16x128xf32>
      %107 = arith.addf %92, %105 : vector<16x128xf32>
      %108 = arith.mulf %102, %102 : vector<16x128xf32>
      %109 = arith.addf %94, %108 : vector<16x128xf32>
      %110 = arith.mulf %105, %105 : vector<16x128xf32>
      %111 = arith.addf %96, %110 : vector<16x128xf32>
      %112 = arith.mulf %102, %105 : vector<16x128xf32>
      %113 = arith.addf %98, %112 : vector<16x128xf32>
      %c96_i32 = arith.constant 96 : i32
      %114 = arith.addi %23, %c96_i32 : i32
      %115 = arith.index_cast %114 : i32 to index
      %c0_24 = arith.constant 0 : index
      %116 = vector.load %arg3[%115, %c0_24] : memref<128x128xf32, #tpu.memory_space<vmem>>, vector<16x128xf32>
      %117 = arith.subf %116, %11 : vector<16x128xf32>
      %118 = arith.index_cast %114 : i32 to index
      %c0_25 = arith.constant 0 : index
      %119 = vector.load %arg4[%118, %c0_25] : memref<128x128xf32, #tpu.memory_space<vmem>>, vector<16x128xf32>
      %120 = arith.subf %119, %12 : vector<16x128xf32>
      %121 = arith.addf %106, %117 : vector<16x128xf32>
      %122 = arith.addf %107, %120 : vector<16x128xf32>
      %123 = arith.mulf %117, %117 : vector<16x128xf32>
      %124 = arith.addf %109, %123 : vector<16x128xf32>
      %125 = arith.mulf %120, %120 : vector<16x128xf32>
      %126 = arith.addf %111, %125 : vector<16x128xf32>
      %127 = arith.mulf %117, %120 : vector<16x128xf32>
      %128 = arith.addf %113, %127 : vector<16x128xf32>
      %c112_i32 = arith.constant 112 : i32
      %129 = arith.addi %23, %c112_i32 : i32
      %130 = arith.index_cast %129 : i32 to index
      %c0_26 = arith.constant 0 : index
      %131 = vector.load %arg3[%130, %c0_26] : memref<128x128xf32, #tpu.memory_space<vmem>>, vector<16x128xf32>
      %132 = arith.subf %131, %11 : vector<16x128xf32>
      %133 = arith.index_cast %129 : i32 to index
      %c0_27 = arith.constant 0 : index
      %134 = vector.load %arg4[%133, %c0_27] : memref<128x128xf32, #tpu.memory_space<vmem>>, vector<16x128xf32>
      %135 = arith.subf %134, %12 : vector<16x128xf32>
      %136 = arith.addf %121, %132 : vector<16x128xf32>
      %137 = arith.addf %122, %135 : vector<16x128xf32>
      %138 = arith.mulf %132, %132 : vector<16x128xf32>
      %139 = arith.addf %124, %138 : vector<16x128xf32>
      %140 = arith.mulf %135, %135 : vector<16x128xf32>
      %141 = arith.addf %126, %140 : vector<16x128xf32>
      %142 = arith.mulf %132, %135 : vector<16x128xf32>
      %143 = arith.addf %128, %142 : vector<16x128xf32>
      %c1_i32_28 = arith.constant 1 : i32
      %c0_29 = arith.constant 0 : index
      %c0_30 = arith.constant 0 : index
      %c0_31 = arith.constant 0 : index
      %144 = vector.load %arg5[%c0_29, %c0_30, %c0_31] : memref<5x16x128xf32, #tpu.memory_space<vmem>>, vector<1x16x128xf32>
      %145 = vector.shape_cast %144 : vector<1x16x128xf32> to vector<16x128xf32>
      %146 = arith.addf %145, %136 : vector<16x128xf32>
      %c0_32 = arith.constant 0 : index
      %c0_33 = arith.constant 0 : index
      %c0_34 = arith.constant 0 : index
      %147 = vector.load %arg5[%c0_32, %c0_33, %c0_34] : memref<5x16x128xf32, #tpu.memory_space<vmem>>, vector<1x16x128xf32>
      %148 = vector.shape_cast %147 : vector<1x16x128xf32> to vector<16x128xf32>
      %149 = vector.shape_cast %146 : vector<16x128xf32> to vector<1x16x128xf32>
      tpu.vector_store %arg5[%c0_32, %c0_33, %c0_34], %149 {strides = array<i32>} : memref<5x16x128xf32, #tpu.memory_space<vmem>>, vector<1x16x128xf32>,
      %c1_35 = arith.constant 1 : index
      %c0_36 = arith.constant 0 : index
      %c0_37 = arith.constant 0 : index
      %150 = vector.load %arg5[%c1_35, %c0_36, %c0_37] : memref<5x16x128xf32, #tpu.memory_space<vmem>>, vector<1x16x128xf32>
      %151 = vector.shape_cast %150 : vector<1x16x128xf32> to vector<16x128xf32>
      %152 = arith.addf %151, %137 : vector<16x128xf32>
      %c1_38 = arith.constant 1 : index
      %c0_39 = arith.constant 0 : index
      %c0_40 = arith.constant 0 : index
      %153 = vector.load %arg5[%c1_38, %c0_39, %c0_40] : memref<5x16x128xf32, #tpu.memory_space<vmem>>, vector<1x16x128xf32>
      %154 = vector.shape_cast %153 : vector<1x16x128xf32> to vector<16x128xf32>
      %155 = vector.shape_cast %152 : vector<16x128xf32> to vector<1x16x128xf32>
      tpu.vector_store %arg5[%c1_38, %c0_39, %c0_40], %155 {strides = array<i32>} : memref<5x16x128xf32, #tpu.memory_space<vmem>>, vector<1x16x128xf32>,
      %c2 = arith.constant 2 : index
      %c0_41 = arith.constant 0 : index
      %c0_42 = arith.constant 0 : index
      %156 = vector.load %arg5[%c2, %c0_41, %c0_42] : memref<5x16x128xf32, #tpu.memory_space<vmem>>, vector<1x16x128xf32>
      %157 = vector.shape_cast %156 : vector<1x16x128xf32> to vector<16x128xf32>
      %158 = arith.addf %157, %139 : vector<16x128xf32>
      %c2_43 = arith.constant 2 : index
      %c0_44 = arith.constant 0 : index
      %c0_45 = arith.constant 0 : index
      %159 = vector.load %arg5[%c2_43, %c0_44, %c0_45] : memref<5x16x128xf32, #tpu.memory_space<vmem>>, vector<1x16x128xf32>
      %160 = vector.shape_cast %159 : vector<1x16x128xf32> to vector<16x128xf32>
      %161 = vector.shape_cast %158 : vector<16x128xf32> to vector<1x16x128xf32>
      tpu.vector_store %arg5[%c2_43, %c0_44, %c0_45], %161 {strides = array<i32>} : memref<5x16x128xf32, #tpu.memory_space<vmem>>, vector<1x16x128xf32>,
      %c3 = arith.constant 3 : index
      %c0_46 = arith.constant 0 : index
      %c0_47 = arith.constant 0 : index
      %162 = vector.load %arg5[%c3, %c0_46, %c0_47] : memref<5x16x128xf32, #tpu.memory_space<vmem>>, vector<1x16x128xf32>
      %163 = vector.shape_cast %162 : vector<1x16x128xf32> to vector<16x128xf32>
      %164 = arith.addf %163, %141 : vector<16x128xf32>
      %c3_48 = arith.constant 3 : index
      %c0_49 = arith.constant 0 : index
      %c0_50 = arith.constant 0 : index
      %165 = vector.load %arg5[%c3_48, %c0_49, %c0_50] : memref<5x16x128xf32, #tpu.memory_space<vmem>>, vector<1x16x128xf32>
      %166 = vector.shape_cast %165 : vector<1x16x128xf32> to vector<16x128xf32>
      %167 = vector.shape_cast %164 : vector<16x128xf32> to vector<1x16x128xf32>
      tpu.vector_store %arg5[%c3_48, %c0_49, %c0_50], %167 {strides = array<i32>} : memref<5x16x128xf32, #tpu.memory_space<vmem>>, vector<1x16x128xf32>,
      %c4 = arith.constant 4 : index
      %c0_51 = arith.constant 0 : index
      %c0_52 = arith.constant 0 : index
      %168 = vector.load %arg5[%c4, %c0_51, %c0_52] : memref<5x16x128xf32, #tpu.memory_space<vmem>>, vector<1x16x128xf32>
      %169 = vector.shape_cast %168 : vector<1x16x128xf32> to vector<16x128xf32>
      %170 = arith.addf %169, %143 : vector<16x128xf32>
      %c4_53 = arith.constant 4 : index
      %c0_54 = arith.constant 0 : index
      %c0_55 = arith.constant 0 : index
      %171 = vector.load %arg5[%c4_53, %c0_54, %c0_55] : memref<5x16x128xf32, #tpu.memory_space<vmem>>, vector<1x16x128xf32>
      %172 = vector.shape_cast %171 : vector<1x16x128xf32> to vector<16x128xf32>
      %173 = vector.shape_cast %170 : vector<16x128xf32> to vector<1x16x128xf32>
      tpu.vector_store %arg5[%c4_53, %c0_54, %c0_55], %173 {strides = array<i32>} : memref<5x16x128xf32, #tpu.memory_space<vmem>>, vector<1x16x128xf32>,
    } else {
    }
    %c0_i32_6 = arith.constant 0 : i32
    %16 = arith.cmpi sgt, %8, %c0_i32_6 : i32
    %c128_i32_7 = arith.constant 128 : i32
    %17 = arith.cmpi slt, %8, %c128_i32_7 : i32
    %18 = arith.andi %16, %17 : i1
    %19 = arith.extui %18 : i1 to i32
    %c0_i32_8 = arith.constant 0 : i32
    %20 = arith.cmpi ne, %19, %c0_i32_8 : i32
    scf.if %20 {
      %cst = arith.constant 0.000000e+00 : f32
      %21 = vector.broadcast %cst : f32 to vector<16x128xf32>
      %c0_i32_9 = arith.constant 0 : i32
      %c128_i32_10 = arith.constant 128 : i32
      %22 = arith.muli %c0_i32_9, %c128_i32_10 : i32
      %23 = tpu.assume_multiple %22, 128 : i32
      %c0_i32_11 = arith.constant 0 : i32
      %24 = arith.addi %23, %c0_i32_11 : i32
      %25 = arith.index_cast %24 : i32 to index
      %c0_12 = arith.constant 0 : index
      %26 = vector.load %arg3[%25, %c0_12] : memref<128x128xf32, #tpu.memory_space<vmem>>, vector<16x128xf32>
      %27 = arith.subf %26, %11 : vector<16x128xf32>
      %28 = arith.index_cast %24 : i32 to index
      %c0_13 = arith.constant 0 : index
      %29 = vector.load %arg4[%28, %c0_13] : memref<128x128xf32, #tpu.memory_space<vmem>>, vector<16x128xf32>
      %30 = arith.subf %29, %12 : vector<16x128xf32>
      %31 = tpu.iota {dimensions = array<i32: 0>} : vector<16x128xi32>
      %32 = vector.broadcast %24 : i32 to vector<16x128xi32>
      %33 = arith.addi %32, %31 : vector<16x128xi32>
      %34 = vector.broadcast %8 : i32 to vector<16x128xi32>
      %35 = arith.cmpi slt, %33, %34 : vector<16x128xi32>
      %cst_14 = arith.constant 0.000000e+00 : f32
      %36 = vector.broadcast %cst_14 : f32 to vector<16x128xf32>
      %37 = arith.select %35, %27, %36 : vector<16x128xi1>, vector<16x128xf32>
      %cst_15 = arith.constant 0.000000e+00 : f32
      %38 = vector.broadcast %cst_15 : f32 to vector<16x128xf32>
      %39 = arith.select %35, %30, %38 : vector<16x128xi1>, vector<16x128xf32>
      %40 = arith.addf %21, %37 : vector<16x128xf32>
      %41 = arith.addf %21, %39 : vector<16x128xf32>
      %42 = arith.mulf %37, %37 : vector<16x128xf32>
      %43 = arith.addf %21, %42 : vector<16x128xf32>
      %44 = arith.mulf %39, %39 : vector<16x128xf32>
      %45 = arith.addf %21, %44 : vector<16x128xf32>
      %46 = arith.mulf %37, %39 : vector<16x128xf32>
      %47 = arith.addf %21, %46 : vector<16x128xf32>
      %c16_i32 = arith.constant 16 : i32
      %48 = arith.addi %23, %c16_i32 : i32
      %49 = arith.index_cast %48 : i32 to index
      %c0_16 = arith.constant 0 : index
      %50 = vector.load %arg3[%49, %c0_16] : memref<128x128xf32, #tpu.memory_space<vmem>>, vector<16x128xf32>
      %51 = arith.subf %50, %11 : vector<16x128xf32>
      %52 = arith.index_cast %48 : i32 to index
      %c0_17 = arith.constant 0 : index
      %53 = vector.load %arg4[%52, %c0_17] : memref<128x128xf32, #tpu.memory_space<vmem>>, vector<16x128xf32>
      %54 = arith.subf %53, %12 : vector<16x128xf32>
      %55 = tpu.iota {dimensions = array<i32: 0>} : vector<16x128xi32>
      %56 = vector.broadcast %48 : i32 to vector<16x128xi32>
      %57 = arith.addi %56, %55 : vector<16x128xi32>
      %58 = vector.broadcast %8 : i32 to vector<16x128xi32>
      %59 = arith.cmpi slt, %57, %58 : vector<16x128xi32>
      %cst_18 = arith.constant 0.000000e+00 : f32
      %60 = vector.broadcast %cst_18 : f32 to vector<16x128xf32>
      %61 = arith.select %59, %51, %60 : vector<16x128xi1>, vector<16x128xf32>
      %cst_19 = arith.constant 0.000000e+00 : f32
      %62 = vector.broadcast %cst_19 : f32 to vector<16x128xf32>
      %63 = arith.select %59, %54, %62 : vector<16x128xi1>, vector<16x128xf32>
      %64 = arith.addf %40, %61 : vector<16x128xf32>
      %65 = arith.addf %41, %63 : vector<16x128xf32>
      %66 = arith.mulf %61, %61 : vector<16x128xf32>
      %67 = arith.addf %43, %66 : vector<16x128xf32>
      %68 = arith.mulf %63, %63 : vector<16x128xf32>
      %69 = arith.addf %45, %68 : vector<16x128xf32>
      %70 = arith.mulf %61, %63 : vector<16x128xf32>
      %71 = arith.addf %47, %70 : vector<16x128xf32>
      %c32_i32 = arith.constant 32 : i32
      %72 = arith.addi %23, %c32_i32 : i32
      %73 = arith.index_cast %72 : i32 to index
      %c0_20 = arith.constant 0 : index
      %74 = vector.load %arg3[%73, %c0_20] : memref<128x128xf32, #tpu.memory_space<vmem>>, vector<16x128xf32>
      %75 = arith.subf %74, %11 : vector<16x128xf32>
      %76 = arith.index_cast %72 : i32 to index
      %c0_21 = arith.constant 0 : index
      %77 = vector.load %arg4[%76, %c0_21] : memref<128x128xf32, #tpu.memory_space<vmem>>, vector<16x128xf32>
      %78 = arith.subf %77, %12 : vector<16x128xf32>
      %79 = tpu.iota {dimensions = array<i32: 0>} : vector<16x128xi32>
      %80 = vector.broadcast %72 : i32 to vector<16x128xi32>
      %81 = arith.addi %80, %79 : vector<16x128xi32>
      %82 = vector.broadcast %8 : i32 to vector<16x128xi32>
      %83 = arith.cmpi slt, %81, %82 : vector<16x128xi32>
      %cst_22 = arith.constant 0.000000e+00 : f32
      %84 = vector.broadcast %cst_22 : f32 to vector<16x128xf32>
      %85 = arith.select %83, %75, %84 : vector<16x128xi1>, vector<16x128xf32>
      %cst_23 = arith.constant 0.000000e+00 : f32
      %86 = vector.broadcast %cst_23 : f32 to vector<16x128xf32>
      %87 = arith.select %83, %78, %86 : vector<16x128xi1>, vector<16x128xf32>
      %88 = arith.addf %64, %85 : vector<16x128xf32>
      %89 = arith.addf %65, %87 : vector<16x128xf32>
      %90 = arith.mulf %85, %85 : vector<16x128xf32>
      %91 = arith.addf %67, %90 : vector<16x128xf32>
      %92 = arith.mulf %87, %87 : vector<16x128xf32>
      %93 = arith.addf %69, %92 : vector<16x128xf32>
      %94 = arith.mulf %85, %87 : vector<16x128xf32>
      %95 = arith.addf %71, %94 : vector<16x128xf32>
      %c48_i32 = arith.constant 48 : i32
      %96 = arith.addi %23, %c48_i32 : i32
      %97 = arith.index_cast %96 : i32 to index
      %c0_24 = arith.constant 0 : index
      %98 = vector.load %arg3[%97, %c0_24] : memref<128x128xf32, #tpu.memory_space<vmem>>, vector<16x128xf32>
      %99 = arith.subf %98, %11 : vector<16x128xf32>
      %100 = arith.index_cast %96 : i32 to index
      %c0_25 = arith.constant 0 : index
      %101 = vector.load %arg4[%100, %c0_25] : memref<128x128xf32, #tpu.memory_space<vmem>>, vector<16x128xf32>
      %102 = arith.subf %101, %12 : vector<16x128xf32>
      %103 = tpu.iota {dimensions = array<i32: 0>} : vector<16x128xi32>
      %104 = vector.broadcast %96 : i32 to vector<16x128xi32>
      %105 = arith.addi %104, %103 : vector<16x128xi32>
      %106 = vector.broadcast %8 : i32 to vector<16x128xi32>
      %107 = arith.cmpi slt, %105, %106 : vector<16x128xi32>
      %cst_26 = arith.constant 0.000000e+00 : f32
      %108 = vector.broadcast %cst_26 : f32 to vector<16x128xf32>
      %109 = arith.select %107, %99, %108 : vector<16x128xi1>, vector<16x128xf32>
      %cst_27 = arith.constant 0.000000e+00 : f32
      %110 = vector.broadcast %cst_27 : f32 to vector<16x128xf32>
      %111 = arith.select %107, %102, %110 : vector<16x128xi1>, vector<16x128xf32>
      %112 = arith.addf %88, %109 : vector<16x128xf32>
      %113 = arith.addf %89, %111 : vector<16x128xf32>
      %114 = arith.mulf %109, %109 : vector<16x128xf32>
      %115 = arith.addf %91, %114 : vector<16x128xf32>
      %116 = arith.mulf %111, %111 : vector<16x128xf32>
      %117 = arith.addf %93, %116 : vector<16x128xf32>
      %118 = arith.mulf %109, %111 : vector<16x128xf32>
      %119 = arith.addf %95, %118 : vector<16x128xf32>
      %c64_i32 = arith.constant 64 : i32
      %120 = arith.addi %23, %c64_i32 : i32
      %121 = arith.index_cast %120 : i32 to index
      %c0_28 = arith.constant 0 : index
      %122 = vector.load %arg3[%121, %c0_28] : memref<128x128xf32, #tpu.memory_space<vmem>>, vector<16x128xf32>
      %123 = arith.subf %122, %11 : vector<16x128xf32>
      %124 = arith.index_cast %120 : i32 to index
      %c0_29 = arith.constant 0 : index
      %125 = vector.load %arg4[%124, %c0_29] : memref<128x128xf32, #tpu.memory_space<vmem>>, vector<16x128xf32>
      %126 = arith.subf %125, %12 : vector<16x128xf32>
      %127 = tpu.iota {dimensions = array<i32: 0>} : vector<16x128xi32>
      %128 = vector.broadcast %120 : i32 to vector<16x128xi32>
      %129 = arith.addi %128, %127 : vector<16x128xi32>
      %130 = vector.broadcast %8 : i32 to vector<16x128xi32>
      %131 = arith.cmpi slt, %129, %130 : vector<16x128xi32>
      %cst_30 = arith.constant 0.000000e+00 : f32
      %132 = vector.broadcast %cst_30 : f32 to vector<16x128xf32>
      %133 = arith.select %131, %123, %132 : vector<16x128xi1>, vector<16x128xf32>
      %cst_31 = arith.constant 0.000000e+00 : f32
      %134 = vector.broadcast %cst_31 : f32 to vector<16x128xf32>
      %135 = arith.select %131, %126, %134 : vector<16x128xi1>, vector<16x128xf32>
      %136 = arith.addf %112, %133 : vector<16x128xf32>
      %137 = arith.addf %113, %135 : vector<16x128xf32>
      %138 = arith.mulf %133, %133 : vector<16x128xf32>
      %139 = arith.addf %115, %138 : vector<16x128xf32>
      %140 = arith.mulf %135, %135 : vector<16x128xf32>
      %141 = arith.addf %117, %140 : vector<16x128xf32>
      %142 = arith.mulf %133, %135 : vector<16x128xf32>
      %143 = arith.addf %119, %142 : vector<16x128xf32>
      %c80_i32 = arith.constant 80 : i32
      %144 = arith.addi %23, %c80_i32 : i32
      %145 = arith.index_cast %144 : i32 to index
      %c0_32 = arith.constant 0 : index
      %146 = vector.load %arg3[%145, %c0_32] : memref<128x128xf32, #tpu.memory_space<vmem>>, vector<16x128xf32>
      %147 = arith.subf %146, %11 : vector<16x128xf32>
      %148 = arith.index_cast %144 : i32 to index
      %c0_33 = arith.constant 0 : index
      %149 = vector.load %arg4[%148, %c0_33] : memref<128x128xf32, #tpu.memory_space<vmem>>, vector<16x128xf32>
      %150 = arith.subf %149, %12 : vector<16x128xf32>
      %151 = tpu.iota {dimensions = array<i32: 0>} : vector<16x128xi32>
      %152 = vector.broadcast %144 : i32 to vector<16x128xi32>
      %153 = arith.addi %152, %151 : vector<16x128xi32>
      %154 = vector.broadcast %8 : i32 to vector<16x128xi32>
      %155 = arith.cmpi slt, %153, %154 : vector<16x128xi32>
      %cst_34 = arith.constant 0.000000e+00 : f32
      %156 = vector.broadcast %cst_34 : f32 to vector<16x128xf32>
      %157 = arith.select %155, %147, %156 : vector<16x128xi1>, vector<16x128xf32>
      %cst_35 = arith.constant 0.000000e+00 : f32
      %158 = vector.broadcast %cst_35 : f32 to vector<16x128xf32>
      %159 = arith.select %155, %150, %158 : vector<16x128xi1>, vector<16x128xf32>
      %160 = arith.addf %136, %157 : vector<16x128xf32>
      %161 = arith.addf %137, %159 : vector<16x128xf32>
      %162 = arith.mulf %157, %157 : vector<16x128xf32>
      %163 = arith.addf %139, %162 : vector<16x128xf32>
      %164 = arith.mulf %159, %159 : vector<16x128xf32>
      %165 = arith.addf %141, %164 : vector<16x128xf32>
      %166 = arith.mulf %157, %159 : vector<16x128xf32>
      %167 = arith.addf %143, %166 : vector<16x128xf32>
      %c96_i32 = arith.constant 96 : i32
      %168 = arith.addi %23, %c96_i32 : i32
      %169 = arith.index_cast %168 : i32 to index
      %c0_36 = arith.constant 0 : index
      %170 = vector.load %arg3[%169, %c0_36] : memref<128x128xf32, #tpu.memory_space<vmem>>, vector<16x128xf32>
      %171 = arith.subf %170, %11 : vector<16x128xf32>
      %172 = arith.index_cast %168 : i32 to index
      %c0_37 = arith.constant 0 : index
      %173 = vector.load %arg4[%172, %c0_37] : memref<128x128xf32, #tpu.memory_space<vmem>>, vector<16x128xf32>
      %174 = arith.subf %173, %12 : vector<16x128xf32>
      %175 = tpu.iota {dimensions = array<i32: 0>} : vector<16x128xi32>
      %176 = vector.broadcast %168 : i32 to vector<16x128xi32>
      %177 = arith.addi %176, %175 : vector<16x128xi32>
      %178 = vector.broadcast %8 : i32 to vector<16x128xi32>
      %179 = arith.cmpi slt, %177, %178 : vector<16x128xi32>
      %cst_38 = arith.constant 0.000000e+00 : f32
      %180 = vector.broadcast %cst_38 : f32 to vector<16x128xf32>
      %181 = arith.select %179, %171, %180 : vector<16x128xi1>, vector<16x128xf32>
      %cst_39 = arith.constant 0.000000e+00 : f32
      %182 = vector.broadcast %cst_39 : f32 to vector<16x128xf32>
      %183 = arith.select %179, %174, %182 : vector<16x128xi1>, vector<16x128xf32>
      %184 = arith.addf %160, %181 : vector<16x128xf32>
      %185 = arith.addf %161, %183 : vector<16x128xf32>
      %186 = arith.mulf %181, %181 : vector<16x128xf32>
      %187 = arith.addf %163, %186 : vector<16x128xf32>
      %188 = arith.mulf %183, %183 : vector<16x128xf32>
      %189 = arith.addf %165, %188 : vector<16x128xf32>
      %190 = arith.mulf %181, %183 : vector<16x128xf32>
      %191 = arith.addf %167, %190 : vector<16x128xf32>
      %c112_i32 = arith.constant 112 : i32
      %192 = arith.addi %23, %c112_i32 : i32
      %193 = arith.index_cast %192 : i32 to index
      %c0_40 = arith.constant 0 : index
      %194 = vector.load %arg3[%193, %c0_40] : memref<128x128xf32, #tpu.memory_space<vmem>>, vector<16x128xf32>
      %195 = arith.subf %194, %11 : vector<16x128xf32>
      %196 = arith.index_cast %192 : i32 to index
      %c0_41 = arith.constant 0 : index
      %197 = vector.load %arg4[%196, %c0_41] : memref<128x128xf32, #tpu.memory_space<vmem>>, vector<16x128xf32>
      %198 = arith.subf %197, %12 : vector<16x128xf32>
      %199 = tpu.iota {dimensions = array<i32: 0>} : vector<16x128xi32>
      %200 = vector.broadcast %192 : i32 to vector<16x128xi32>
      %201 = arith.addi %200, %199 : vector<16x128xi32>
      %202 = vector.broadcast %8 : i32 to vector<16x128xi32>
      %203 = arith.cmpi slt, %201, %202 : vector<16x128xi32>
      %cst_42 = arith.constant 0.000000e+00 : f32
      %204 = vector.broadcast %cst_42 : f32 to vector<16x128xf32>
      %205 = arith.select %203, %195, %204 : vector<16x128xi1>, vector<16x128xf32>
      %cst_43 = arith.constant 0.000000e+00 : f32
      %206 = vector.broadcast %cst_43 : f32 to vector<16x128xf32>
      %207 = arith.select %203, %198, %206 : vector<16x128xi1>, vector<16x128xf32>
      %208 = arith.addf %184, %205 : vector<16x128xf32>
      %209 = arith.addf %185, %207 : vector<16x128xf32>
      %210 = arith.mulf %205, %205 : vector<16x128xf32>
      %211 = arith.addf %187, %210 : vector<16x128xf32>
      %212 = arith.mulf %207, %207 : vector<16x128xf32>
      %213 = arith.addf %189, %212 : vector<16x128xf32>
      %214 = arith.mulf %205, %207 : vector<16x128xf32>
      %215 = arith.addf %191, %214 : vector<16x128xf32>
      %c1_i32_44 = arith.constant 1 : i32
      %c0_45 = arith.constant 0 : index
      %c0_46 = arith.constant 0 : index
      %c0_47 = arith.constant 0 : index
      %216 = vector.load %arg5[%c0_45, %c0_46, %c0_47] : memref<5x16x128xf32, #tpu.memory_space<vmem>>, vector<1x16x128xf32>
      %217 = vector.shape_cast %216 : vector<1x16x128xf32> to vector<16x128xf32>
      %218 = arith.addf %217, %208 : vector<16x128xf32>
      %c0_48 = arith.constant 0 : index
      %c0_49 = arith.constant 0 : index
      %c0_50 = arith.constant 0 : index
      %219 = vector.load %arg5[%c0_48, %c0_49, %c0_50] : memref<5x16x128xf32, #tpu.memory_space<vmem>>, vector<1x16x128xf32>
      %220 = vector.shape_cast %219 : vector<1x16x128xf32> to vector<16x128xf32>
      %221 = vector.shape_cast %218 : vector<16x128xf32> to vector<1x16x128xf32>
      tpu.vector_store %arg5[%c0_48, %c0_49, %c0_50], %221 {strides = array<i32>} : memref<5x16x128xf32, #tpu.memory_space<vmem>>, vector<1x16x128xf32>,
      %c1_51 = arith.constant 1 : index
      %c0_52 = arith.constant 0 : index
      %c0_53 = arith.constant 0 : index
      %222 = vector.load %arg5[%c1_51, %c0_52, %c0_53] : memref<5x16x128xf32, #tpu.memory_space<vmem>>, vector<1x16x128xf32>
      %223 = vector.shape_cast %222 : vector<1x16x128xf32> to vector<16x128xf32>
      %224 = arith.addf %223, %209 : vector<16x128xf32>
      %c1_54 = arith.constant 1 : index
      %c0_55 = arith.constant 0 : index
      %c0_56 = arith.constant 0 : index
      %225 = vector.load %arg5[%c1_54, %c0_55, %c0_56] : memref<5x16x128xf32, #tpu.memory_space<vmem>>, vector<1x16x128xf32>
      %226 = vector.shape_cast %225 : vector<1x16x128xf32> to vector<16x128xf32>
      %227 = vector.shape_cast %224 : vector<16x128xf32> to vector<1x16x128xf32>
      tpu.vector_store %arg5[%c1_54, %c0_55, %c0_56], %227 {strides = array<i32>} : memref<5x16x128xf32, #tpu.memory_space<vmem>>, vector<1x16x128xf32>,
      %c2 = arith.constant 2 : index
      %c0_57 = arith.constant 0 : index
      %c0_58 = arith.constant 0 : index
      %228 = vector.load %arg5[%c2, %c0_57, %c0_58] : memref<5x16x128xf32, #tpu.memory_space<vmem>>, vector<1x16x128xf32>
      %229 = vector.shape_cast %228 : vector<1x16x128xf32> to vector<16x128xf32>
      %230 = arith.addf %229, %211 : vector<16x128xf32>
      %c2_59 = arith.constant 2 : index
      %c0_60 = arith.constant 0 : index
      %c0_61 = arith.constant 0 : index
      %231 = vector.load %arg5[%c2_59, %c0_60, %c0_61] : memref<5x16x128xf32, #tpu.memory_space<vmem>>, vector<1x16x128xf32>
      %232 = vector.shape_cast %231 : vector<1x16x128xf32> to vector<16x128xf32>
      %233 = vector.shape_cast %230 : vector<16x128xf32> to vector<1x16x128xf32>
      tpu.vector_store %arg5[%c2_59, %c0_60, %c0_61], %233 {strides = array<i32>} : memref<5x16x128xf32, #tpu.memory_space<vmem>>, vector<1x16x128xf32>,
      %c3 = arith.constant 3 : index
      %c0_62 = arith.constant 0 : index
      %c0_63 = arith.constant 0 : index
      %234 = vector.load %arg5[%c3, %c0_62, %c0_63] : memref<5x16x128xf32, #tpu.memory_space<vmem>>, vector<1x16x128xf32>
      %235 = vector.shape_cast %234 : vector<1x16x128xf32> to vector<16x128xf32>
      %236 = arith.addf %235, %213 : vector<16x128xf32>
      %c3_64 = arith.constant 3 : index
      %c0_65 = arith.constant 0 : index
      %c0_66 = arith.constant 0 : index
      %237 = vector.load %arg5[%c3_64, %c0_65, %c0_66] : memref<5x16x128xf32, #tpu.memory_space<vmem>>, vector<1x16x128xf32>
      %238 = vector.shape_cast %237 : vector<1x16x128xf32> to vector<16x128xf32>
      %239 = vector.shape_cast %236 : vector<16x128xf32> to vector<1x16x128xf32>
      tpu.vector_store %arg5[%c3_64, %c0_65, %c0_66], %239 {strides = array<i32>} : memref<5x16x128xf32, #tpu.memory_space<vmem>>, vector<1x16x128xf32>,
      %c4 = arith.constant 4 : index
      %c0_67 = arith.constant 0 : index
      %c0_68 = arith.constant 0 : index
      %240 = vector.load %arg5[%c4, %c0_67, %c0_68] : memref<5x16x128xf32, #tpu.memory_space<vmem>>, vector<1x16x128xf32>
      %241 = vector.shape_cast %240 : vector<1x16x128xf32> to vector<16x128xf32>
      %242 = arith.addf %241, %215 : vector<16x128xf32>
      %c4_69 = arith.constant 4 : index
      %c0_70 = arith.constant 0 : index
      %c0_71 = arith.constant 0 : index
      %243 = vector.load %arg5[%c4_69, %c0_70, %c0_71] : memref<5x16x128xf32, #tpu.memory_space<vmem>>, vector<1x16x128xf32>
      %244 = vector.shape_cast %243 : vector<1x16x128xf32> to vector<16x128xf32>
      %245 = vector.shape_cast %242 : vector<16x128xf32> to vector<1x16x128xf32>
      tpu.vector_store %arg5[%c4_69, %c0_70, %c0_71], %245 {strides = array<i32>} : memref<5x16x128xf32, #tpu.memory_space<vmem>>, vector<1x16x128xf32>,
    } else {
    }
    return
  }
  func.func @transform_0(%arg0: i32, %arg1: i32) -> i32 {
    %c0_i32 = arith.constant 0 : i32
    %c0_i32_0 = arith.constant 0 : i32
    return %c0_i32 : i32
  }
  func.func @transform_1(%arg0: i32, %arg1: i32) -> (i32, i32) {
    %c1_i32 = arith.constant 1 : i32
    %0 = arith.muli %arg0, %c1_i32 : i32
    %1 = arith.addi %0, %arg1 : i32
    %c0_i32 = arith.constant 0 : i32
    %2 = arith.minsi %1, %c0_i32 : i32
    %c0_i32_0 = arith.constant 0 : i32
    %c0_i32_1 = arith.constant 0 : i32
    return %2, %c0_i32_0 : i32, i32
  }
  func.func @transform_2(%arg0: i32, %arg1: i32) -> (i32, i32) {
    %c1_i32 = arith.constant 1 : i32
    %0 = arith.muli %arg0, %c1_i32 : i32
    %1 = arith.addi %0, %arg1 : i32
    %c0_i32 = arith.constant 0 : i32
    %2 = arith.minsi %1, %c0_i32 : i32
    %c0_i32_0 = arith.constant 0 : i32
    %c0_i32_1 = arith.constant 0 : i32
    return %2, %c0_i32_0 : i32, i32
  }
  func.func @transform_3(%arg0: i32, %arg1: i32) -> (i32, i32, i32) {
    %c0_i32 = arith.constant 0 : i32
    %c0_i32_0 = arith.constant 0 : i32
    %c0_i32_1 = arith.constant 0 : i32
    return %arg0, %c0_i32, %c0_i32_0 : i32, i32, i32
  }
}

</mosaic_0001>

<llo_original>
// kernel: tpu_custom_call.1
$region0: #{tpu_custom_call.1}
  #allocation0 [shape = 'u32[]', space=smem, size = 0x4, offset = 0x4, fixed_abs, tag = 'smem constant byte address 0x4 - core index']
  #allocation1 [shape = 'u32[144,128]{1,0:T(1,128)}', space=vmem, size = 0x12000, scoped, tag = 'internal scratch']
  %s0 = inlined_call_operand.hbm [shape: f32[2], index: 0, kind: input, shape index: {}]
  %s1 = inlined_call_operand.vmem [shape: f32[1,128], index: 1, kind: input, shape index: {}]
  %s2 = inlined_call_operand.vmem [shape: f32[1,128], index: 2, kind: input, shape index: {}]
  %s3 = inlined_call_operand.hbm [shape: f32[10,16,128], index: 3, kind: output, shape index: {}]
  %s4 = sld [smem:[#allocation0]]
  $region61: #{tpu_custom_call.1} parent=0
    _
  %s6 = ssub.s32 1, %s4
  %s7 = scalar_select 0, %s6, %s4
  $region1: #{tpu_custom_call.1} parent=0
    #allocation2 [shape = 'u8[512]{0}', space=smem, size = 0x200, scoped, tag = 'input window, operand 0, single buffered']
    #allocation3 [shape = 's32[2]{0}', space=sflag, size = 0x8, scoped, tag = 'scoped memory for tpu_custom_call.1']
    #allocation4 [shape = 's32[2]{0}', space=sflag, size = 0x8, scoped, tag = 'scoped memory for tpu_custom_call.1']
    #allocation5 [shape = 'u8[81920]{0}', space=vmem, size = 0x14000, scoped, tag = 'output window, operand 0']
    %8 = vsyncpa [#allocation4], 0
    %9 = vsyncpa [#allocation3], 0
    %s10 = scalar_lea.sflag [#allocation3], 1
    %11 = vsyncpa %s10, 0
    loop: start=0, step=1, limit=4
    $region2: #{tpu_custom_call.1} parent=1 // loop_pre_header
      _
    $region3: #{tpu_custom_call.1} parent=1 // loop_header
      %s13 = sphi 0, %s17
      %p14 = scmp.ge.s32.totalorder %s13, 4
      %s20 = sphi 0, %s32
      %s21 = sphi 0, %s28
      %s22 = sphi 0, %s20
      %s23 = sphi 0, %s21
      %s24 = sphi 0, %s22
      %s25 = sphi 0, %s23
      %s33 = sphi 0, %s33
      %s35 = sphi 0, %s33
      %s36 = sphi 0, %s35
      %s50 = sphi 0, %s36
      %s62 = sphi 0, %s64
      %s65 = sphi 0, %s62
      %s66 = sphi 0, %s65
      %s82 = sphi 0, %s66
      %s94 = sphi 0, %s96
      %s97 = sphi 0, %s94
      %s98 = sphi 0, %s97
      %s114 = sphi 0, %s98
      %s120 = sphi 0, %s122
      %s123 = sphi 0, %s120
      %s124 = sphi 0, %s123
      %s140 = sphi 0, %s124
    $region4: #{tpu_custom_call.1} parent=1 // loop_header_branch
      %16 = sbr.rel (%p14) target = $region8
    $region5: #{tpu_custom_call.1} parent=1 // loop_body
      %s18 = ssub.s32 %s13, 1
      %s19 = ssub.s32 %s13, 2
      %s26 = sadd.s32 1, %s21
      %p27 = scmp.ge.s32.totalorder %s26, 1
      %s28 = scalar_select %p27, 0, %s26
      %s29 = sadd.s32 1, %s20
      %s30 = scalar_select %p27, %s29, %s20
      %p31 = scmp.ge.s32.totalorder %s30, 2
      %s32 = scalar_select %p31, 0, %s30
      %s34 = sadd.s32 %s33, 1
      %p37 = scmp.eq.s32.totalorder %s13, 1
      %p38 = scmp.ne.s32.totalorder %s33, %s35
      %p39 = scmp.eq.s32.totalorder %s13, 0
      %p40 = por %p38, %p39
      %p41 = scmp.ne.s32.totalorder %s33, %s35
      %p42 = scmp.eq.s32.totalorder %s18, 1
      %p43 = por %p41, %p42
      %p44 = scmp.ne.s32.totalorder %s35, %s36
      %p45 = scmp.eq.s32.totalorder %s18, 0
      %p46 = por %p44, %p45
      %p47 = scmp.ne.s32.totalorder %s35, %s36
      %p48 = scmp.eq.s32.totalorder %s19, 1
      %p49 = por %p47, %p48
      %p51 = scmp.ne.s32.totalorder %s36, %s50
      %p52 = scmp.eq.s32.totalorder %s19, 0
      %p53 = por %p51, %p52
      %s54 = sadd.s32 %s20, %s21
      %p55 = scmp.lt.s32.totalorder %s54, 0
      %s56 = scalar_select %p55, %s54, 0
      %s57 = sadd.s32 %s32, %s28
      %p58 = scmp.lt.s32.totalorder %s57, 0
      %s59 = scalar_select %p58, %s57, 0
      %s60 = ssub.s32 %s56, %s59
      %p61 = scmp.eq.s32.totalorder %s60, 0
      %s63 = sadd.s32 %s62, 1
      %s64 = scalar_select %p61, %s62, %s63
      %p67 = pneg %p61
      %p68 = scmp.eq.s32.totalorder %s13, 1
      %p69 = por %p67, %p68
      %p70 = scmp.ne.s32.totalorder %s62, %s65
      %p71 = scmp.eq.s32.totalorder %s13, 0
      %p72 = por %p70, %p71
      %p73 = scmp.ne.s32.totalorder %s62, %s65
      %p74 = scmp.eq.s32.totalorder %s18, 1
      %p75 = por %p73, %p74
      %p76 = scmp.ne.s32.totalorder %s65, %s66
      %p77 = scmp.eq.s32.totalorder %s18, 0
      %p78 = por %p76, %p77
      %p79 = scmp.ne.s32.totalorder %s65, %s66
      %p80 = scmp.eq.s32.totalorder %s19, 1
      %p81 = por %p79, %p80
      %p83 = scmp.ne.s32.totalorder %s66, %s82
      %p84 = scmp.eq.s32.totalorder %s19, 0
      %p85 = por %p83, %p84
      %s86 = sadd.s32 %s20, %s21
      %p87 = scmp.lt.s32.totalorder %s86, 0
      %s88 = scalar_select %p87, %s86, 0
      %s89 = sadd.s32 %s32, %s28
      %p90 = scmp.lt.s32.totalorder %s89, 0
      %s91 = scalar_select %p90, %s89, 0
      %s92 = ssub.s32 %s88, %s91
      %p93 = scmp.eq.s32.totalorder %s92, 0
      %s95 = sadd.s32 %s94, 1
      %s96 = scalar_select %p93, %s94, %s95
      %p99 = pneg %p93
      %p100 = scmp.eq.s32.totalorder %s13, 1
      %p101 = por %p99, %p100
      %p102 = scmp.ne.s32.totalorder %s94, %s97
      %p103 = scmp.eq.s32.totalorder %s13, 0
      %p104 = por %p102, %p103
      %p105 = scmp.ne.s32.totalorder %s94, %s97
      %p106 = scmp.eq.s32.totalorder %s18, 1
      %p107 = por %p105, %p106
      %p108 = scmp.ne.s32.totalorder %s97, %s98
      %p109 = scmp.eq.s32.totalorder %s18, 0
      %p110 = por %p108, %p109
      %p111 = scmp.ne.s32.totalorder %s97, %s98
      %p112 = scmp.eq.s32.totalorder %s19, 1
      %p113 = por %p111, %p112
      %p115 = scmp.ne.s32.totalorder %s98, %s114
      %p116 = scmp.eq.s32.totalorder %s19, 0
      %p117 = por %p115, %p116
      %s118 = ssub.s32 %s20, %s32
      %p119 = scmp.eq.s32.totalorder %s118, 0
      %s121 = sadd.s32 %s120, 1
      %s122 = scalar_select %p119, %s120, %s121
      %p125 = pneg %p119
      %p126 = scmp.eq.s32.totalorder %s13, 1
      %p127 = por %p125, %p126
      %p128 = scmp.ne.s32.totalorder %s120, %s123
      %p129 = scmp.eq.s32.totalorder %s13, 0
      %p130 = por %p128, %p129
      %p131 = scmp.ne.s32.totalorder %s120, %s123
      %p132 = scmp.eq.s32.totalorder %s18, 1
      %p133 = por %p131, %p132
      %p134 = scmp.ne.s32.totalorder %s123, %s124
      %p135 = scmp.eq.s32.totalorder %s18, 0
      %p136 = por %p134, %p135
      %p137 = scmp.ne.s32.totalorder %s123, %s124
      %p138 = scmp.eq.s32.totalorder %s19, 1
      %p139 = por %p137, %p138
      %p141 = scmp.ne.s32.totalorder %s124, %s140
      %p142 = scmp.eq.s32.totalorder %s19, 0
      %p143 = por %p141, %p142
      %p144 = scmp.le.s32.totalorder 1, %s13
      %p145 = scmp.lt.s32.totalorder %s13, 3
      %p146 = pnand %p144, %p145
      %p147 = pneg %p146
      // Predicated region
      $region9: #{tpu_custom_call.1} parent=5 // pred_check
        _
      $region10: #{tpu_custom_call.1} parent=5 // pred_check_branch
        %149 = sbr.rel (%p146) target = $region12
      $region11: #{tpu_custom_call.1} parent=5 // pred_region
        %s150 = ssub.s32 %s13, 1
        // Predicated region
        $region13: #{tpu_custom_call.1} parent=11 // pred_check
          %p151 = pneg %p46
        $region14: #{tpu_custom_call.1} parent=11 // pred_check_branch
          %153 = sbr.rel (%p151) target = $region16
        $region15: #{tpu_custom_call.1} parent=11 // pred_region
          %s155 = ssub.s32 16, 16
          %156 = vsyncadd [#allocation4], %s155
          %159 = dma.hbm_to_smem %s0, 16, [#allocation2], [#allocation4]
        $region16: #{tpu_custom_call.1} parent=11 // pred_fallthru
          _
      $region12: #{tpu_custom_call.1} parent=5 // pred_fallthru
        _
      %p160 = scmp.lt.s32.totalorder %s13, 2
      // Predicated region
      $region17: #{tpu_custom_call.1} parent=5 // pred_check
        %p161 = pneg %p160
      $region18: #{tpu_custom_call.1} parent=5 // pred_check_branch
        %163 = sbr.rel (%p161) target = $region20
      $region19: #{tpu_custom_call.1} parent=5 // pred_region
        // Predicated region
        $region21: #{tpu_custom_call.1} parent=19 // pred_check
          %p164 = pneg %p72
        $region22: #{tpu_custom_call.1} parent=19 // pred_check_branch
          %166 = sbr.rel (%p164) target = $region24
        $region23: #{tpu_custom_call.1} parent=19 // pred_region
          %s167 = sadd.s32 %s20, %s21
          %p168 = scmp.lt.s32.totalorder %s167, 0
          %s169 = scalar_select %p168, %s167, 0
          %s170 = smul.u32 128, %s169
          %s171 = ssub.s32 1, %s170
          %s172 = smul.u32 16, %s171
          %p173 = scmp.lt.s32.totalorder %s170, 0
          %s174 = scalar_select %p173, %s170, 0
          %s175 = scalar_lea.vmem %s1, %s174
          %s176 = sadd.s32 %s20, %s21
          %p177 = scmp.lt.s32.totalorder %s176, 0
          %s178 = scalar_select %p177, %s176, 0
          %s179 = smul.u32 128, %s178
          %s180 = ssub.s32 1, %s179
          %s181 = smul.u32 16, %s180
        $region24: #{tpu_custom_call.1} parent=19 // pred_fallthru
          _
        // Predicated region
        $region25: #{tpu_custom_call.1} parent=19 // pred_check
          %p182 = pneg %p104
        $region26: #{tpu_custom_call.1} parent=19 // pred_check_branch
          %184 = sbr.rel (%p182) target = $region28
        $region27: #{tpu_custom_call.1} parent=19 // pred_region
          %s185 = sadd.s32 %s20, %s21
          %p186 = scmp.lt.s32.totalorder %s185, 0
          %s187 = scalar_select %p186, %s185, 0
          %s188 = smul.u32 128, %s187
          %s189 = ssub.s32 1, %s188
          %s190 = smul.u32 16, %s189
          %p191 = scmp.lt.s32.totalorder %s188, 0
          %s192 = scalar_select %p191, %s188, 0
          %s193 = scalar_lea.vmem %s2, %s192
          %s194 = sadd.s32 %s20, %s21
          %p195 = scmp.lt.s32.totalorder %s194, 0
          %s196 = scalar_select %p195, %s194, 0
          %s197 = smul.u32 128, %s196
          %s198 = ssub.s32 1, %s197
          %s199 = smul.u32 16, %s198
        $region28: #{tpu_custom_call.1} parent=19 // pred_fallthru
          _
      $region20: #{tpu_custom_call.1} parent=5 // pred_fallthru
        _
      %p200 = scmp.le.s32.totalorder 1, %s13
      %p201 = scmp.lt.s32.totalorder %s13, 3
      %p202 = pnand %p200, %p201
      %p203 = pneg %p202
      // Predicated region
      $region29: #{tpu_custom_call.1} parent=5 // pred_check
        _
      $region30: #{tpu_custom_call.1} parent=5 // pred_check_branch
        %205 = sbr.rel (%p202) target = $region32
      $region31: #{tpu_custom_call.1} parent=5 // pred_region
        %s206 = ssub.s32 %s13, 1
        // Predicated region
        $region33: #{tpu_custom_call.1} parent=31 // pred_check
          %p207 = pneg %p46
        $region34: #{tpu_custom_call.1} parent=31 // pred_check_branch
          %209 = sbr.rel (%p207) target = $region36
        $region35: #{tpu_custom_call.1} parent=31 // pred_region
          %210 = dma.done [#allocation4], 16
        $region36: #{tpu_custom_call.1} parent=31 // pred_fallthru
          _
        %211 = sfence
        %p212 = pneg %p46
        %p213 = pneg %p43
        %s214 = sadd.s32 %s22, %s23
        %p215 = scmp.lt.s32.totalorder %s214, 0
        %s216 = scalar_select %p215, %s214, 0
        %s217 = smul.u32 128, %s216
        %s218 = ssub.s32 1, %s217
        %s219 = smul.u32 16, %s218
        %p220 = scmp.lt.s32.totalorder %s217, 0
        %s221 = scalar_select %p220, %s217, 0
        %s222 = scalar_lea.vmem %s1, %s221
        %p223 = pneg %p78
        %p224 = pneg %p75
        %s225 = sadd.s32 %s22, %s23
        %p226 = scmp.lt.s32.totalorder %s225, 0
        %s227 = scalar_select %p226, %s225, 0
        %s228 = smul.u32 128, %s227
        %s229 = ssub.s32 1, %s228
        %s230 = smul.u32 16, %s229
        %p231 = scmp.lt.s32.totalorder %s228, 0
        %s232 = scalar_select %p231, %s228, 0
        %s233 = scalar_lea.vmem %s2, %s232
        %p234 = pneg %p110
        %p235 = pneg %p107
        %p236 = pneg %p136
        %p237 = pneg %p133
        %s238 = sand.u32 %s123, 1
        %s239 = scalar_lea.sflag [#allocation3], %s238
        %s240 = sand.u32 %s123, 1
        %s241 = smul.addr %s240, 80
        %s242 = scalar_lea.vmem [#allocation5], %s241
        %s243 = sadd.s32 %s22, %s23
        %p244 = scmp.lt.s32.totalorder %s243, 0
        %s245 = scalar_select %p244, %s243, 0
        %s246 = smul.u32 128, %s245
        %s247 = ssub.s32 1, %s246
        %s248 = smul.u32 16, %s247
        %p249 = scmp.lt.s32.totalorder %s246, 0
        %s250 = scalar_select %p249, %s246, 0
        %s251 = scalar_lea.vmem %s1, %s250
        %s252 = sadd.s32 %s22, %s23
        %p253 = scmp.lt.s32.totalorder %s252, 0
        %s254 = scalar_select %p253, %s252, 0
        %s255 = smul.u32 128, %s254
        %s256 = ssub.s32 1, %s255
        %s257 = smul.u32 16, %s256
        %s258 = sadd.s32 %s22, %s23
        %p259 = scmp.lt.s32.totalorder %s258, 0
        %s260 = scalar_select %p259, %s258, 0
        %s261 = smul.u32 128, %s260
        %s262 = ssub.s32 1, %s261
        %s263 = smul.u32 16, %s262
        %p264 = scmp.lt.s32.totalorder %s261, 0
        %s265 = scalar_select %p264, %s261, 0
        %s266 = scalar_lea.vmem %s2, %s265
        %s267 = sadd.s32 %s22, %s23
        %p268 = scmp.lt.s32.totalorder %s267, 0
        %s269 = scalar_select %p268, %s267, 0
        %s270 = smul.u32 128, %s269
        %s271 = ssub.s32 1, %s270
        %s272 = smul.u32 16, %s271
        %s273 = smul.u32 5, %s22
        %p274 = scmp.eq.s32.totalorder %s23, 0
        // Predicated region
        $region37: #{tpu_custom_call.1} parent=31 // pred_check
          %p275 = pneg %p274
        $region38: #{tpu_custom_call.1} parent=31 // pred_check_branch
          %277 = sbr.rel (%p275) target = $region40
        $region39: #{tpu_custom_call.1} parent=31 // pred_region
          %278 = vst [vmem:[%s242] sm:$0xff] 0.0
          %279 = vst [vmem:[%s242 + $0x8] sm:$0xff] 0.0
          %280 = vst [vmem:[%s242 + $0x10] sm:$0xff] 0.0
          %281 = vst [vmem:[%s242 + $0x18] sm:$0xff] 0.0
          %282 = vst [vmem:[%s242 + $0x20] sm:$0xff] 0.0
          %283 = vst [vmem:[%s242 + $0x28] sm:$0xff] 0.0
          %284 = vst [vmem:[%s242 + $0x30] sm:$0xff] 0.0
          %285 = vst [vmem:[%s242 + $0x38] sm:$0xff] 0.0
          %286 = vst [vmem:[%s242 + $0x40] sm:$0xff] 0.0
          %287 = vst [vmem:[%s242 + $0x48] sm:$0xff] 0.0
        $region40: #{tpu_custom_call.1} parent=31 // pred_fallthru
          _
        %s288 = sadd.s32 %s22, %s23
        %s289 = smul.u32 %s288, 128
        %s290 = ssub.s32 1, %s289
        %p291 = scmp.gt.s32.totalorder %s290, 0
        %s292 = scalar_select %p291, %s290, 0
        %p293 = scmp.lt.s32.totalorder %s292, 128
        %s294 = scalar_select %p293, %s292, 128
        %s295 = sld [smem:[#allocation2]]
        %s296 = sld [smem:[#allocation2 + $0x1]]
        %v297 = vstv %s295
        %v298 = vstv %s296
        %p299 = scmp.eq.s32.totalorder %s294, 128
        // Predicated region
        $region41: #{tpu_custom_call.1} parent=31 // pred_check
          %p300 = pneg %p299
        $region42: #{tpu_custom_call.1} parent=31 // pred_check_branch
          %302 = sbr.rel (%p300) target = $region44
        $region43: #{tpu_custom_call.1} parent=31 // pred_region
          %v303 = vld [vmem:[%s251] sm:$0xff]
          %v304 = vld [vmem:[%s251 + $0x8] sm:$0xff]
          %v305 = vsub.f32 %v303, %v297
          %v306 = vsub.f32 %v304, %v297
          %v307 = vld [vmem:[%s266] sm:$0xff]
          %v308 = vld [vmem:[%s266 + $0x8] sm:$0xff]
          %v309 = vsub.f32 %v307, %v298
          %v310 = vsub.f32 %v308, %v298
          %v311 = vadd.f32 %v305, 0.0
          %v312 = vadd.f32 %v306, 0.0
          %v313 = vadd.f32 %v309, 0.0
          %v314 = vadd.f32 %v310, 0.0
          %v315 = vmul.f32 %v305, %v305
          %v316 = vmul.f32 %v306, %v306
          %v317 = vadd.f32 %v315, 0.0
          %v318 = vadd.f32 %v316, 0.0
          %v319 = vmul.f32 %v309, %v309
          %v320 = vmul.f32 %v310, %v310
          %v321 = vadd.f32 %v319, 0.0
          %v322 = vadd.f32 %v320, 0.0
          %v323 = vmul.f32 %v305, %v309
          %v324 = vmul.f32 %v306, %v310
          %v325 = vadd.f32 %v323, 0.0
          %v326 = vadd.f32 %v324, 0.0
          %s327 = sadd.s32 0, 16
          %s328 = scalar_lea.vmem %s251, %s327
          %v329 = vld [vmem:[%s328] sm:$0xff]
          %v330 = vld [vmem:[%s328 + $0x8] sm:$0xff]
          %v331 = vsub.f32 %v329, %v297
          %v332 = vsub.f32 %v330, %v297
          %s333 = scalar_lea.vmem %s266, %s327
          %v334 = vld [vmem:[%s333] sm:$0xff]
          %v335 = vld [vmem:[%s333 + $0x8] sm:$0xff]
          %v336 = vsub.f32 %v334, %v298
          %v337 = vsub.f32 %v335, %v298
          %v338 = vadd.f32 %v311, %v331
          %v339 = vadd.f32 %v312, %v332
          %v340 = vadd.f32 %v313, %v336
          %v341 = vadd.f32 %v314, %v337
          %v342 = vmul.f32 %v331, %v331
          %v343 = vmul.f32 %v332, %v332
          %v344 = vadd.f32 %v317, %v342
          %v345 = vadd.f32 %v318, %v343
          %v346 = vmul.f32 %v336, %v336
          %v347 = vmul.f32 %v337, %v337
          %v348 = vadd.f32 %v321, %v346
          %v349 = vadd.f32 %v322, %v347
          %v350 = vmul.f32 %v331, %v336
          %v351 = vmul.f32 %v332, %v337
          %v352 = vadd.f32 %v325, %v350
          %v353 = vadd.f32 %v326, %v351
          %s354 = sadd.s32 0, 32
          %s355 = scalar_lea.vmem %s251, %s354
          %v356 = vld [vmem:[%s355] sm:$0xff]
          %v357 = vld [vmem:[%s355 + $0x8] sm:$0xff]
          %v358 = vsub.f32 %v356, %v297
          %v359 = vsub.f32 %v357, %v297
          %s360 = scalar_lea.vmem %s266, %s354
          %v361 = vld [vmem:[%s360] sm:$0xff]
          %v362 = vld [vmem:[%s360 + $0x8] sm:$0xff]
          %v363 = vsub.f32 %v361, %v298
          %v364 = vsub.f32 %v362, %v298
          %v365 = vadd.f32 %v338, %v358
          %v366 = vadd.f32 %v339, %v359
          %v367 = vadd.f32 %v340, %v363
          %v368 = vadd.f32 %v341, %v364
          %v369 = vmul.f32 %v358, %v358
          %v370 = vmul.f32 %v359, %v359
          %v371 = vadd.f32 %v344, %v369
          %v372 = vadd.f32 %v345, %v370
          %v373 = vmul.f32 %v363, %v363
          %v374 = vmul.f32 %v364, %v364
          %v375 = vadd.f32 %v348, %v373
          %v376 = vadd.f32 %v349, %v374
          %v377 = vmul.f32 %v358, %v363
          %v378 = vmul.f32 %v359, %v364
          %v379 = vadd.f32 %v352, %v377
          %v380 = vadd.f32 %v353, %v378
          %s381 = sadd.s32 0, 48
          %s382 = scalar_lea.vmem %s251, %s381
          %v383 = vld [vmem:[%s382] sm:$0xff]
          %v384 = vld [vmem:[%s382 + $0x8] sm:$0xff]
          %v385 = vsub.f32 %v383, %v297
          %v386 = vsub.f32 %v384, %v297
          %s387 = scalar_lea.vmem %s266, %s381
          %v388 = vld [vmem:[%s387] sm:$0xff]
          %v389 = vld [vmem:[%s387 + $0x8] sm:$0xff]
          %v390 = vsub.f32 %v388, %v298
          %v391 = vsub.f32 %v389, %v298
          %v392 = vadd.f32 %v365, %v385
          %v393 = vadd.f32 %v366, %v386
          %v394 = vadd.f32 %v367, %v390
          %v395 = vadd.f32 %v368, %v391
          %v396 = vmul.f32 %v385, %v385
          %v397 = vmul.f32 %v386, %v386
          %v398 = vadd.f32 %v371, %v396
          %v399 = vadd.f32 %v372, %v397
          %v400 = vmul.f32 %v390, %v390
          %v401 = vmul.f32 %v391, %v391
          %v402 = vadd.f32 %v375, %v400
          %v403 = vadd.f32 %v376, %v401
          %v404 = vmul.f32 %v385, %v390
          %v405 = vmul.f32 %v386, %v391
          %v406 = vadd.f32 %v379, %v404
          %v407 = vadd.f32 %v380, %v405
          %s408 = sadd.s32 0, 64
          %s409 = scalar_lea.vmem %s251, %s408
          %v410 = vld [vmem:[%s409] sm:$0xff]
          %v411 = vld [vmem:[%s409 + $0x8] sm:$0xff]
          %v412 = vsub.f32 %v410, %v297
          %v413 = vsub.f32 %v411, %v297
          %s414 = scalar_lea.vmem %s266, %s408
          %v415 = vld [vmem:[%s414] sm:$0xff]
          %v416 = vld [vmem:[%s414 + $0x8] sm:$0xff]
          %v417 = vsub.f32 %v415, %v298
          %v418 = vsub.f32 %v416, %v298
          %v419 = vadd.f32 %v392, %v412
          %v420 = vadd.f32 %v393, %v413
          %v421 = vadd.f32 %v394, %v417
          %v422 = vadd.f32 %v395, %v418
          %v423 = vmul.f32 %v412, %v412
          %v424 = vmul.f32 %v413, %v413
          %v425 = vadd.f32 %v398, %v423
          %v426 = vadd.f32 %v399, %v424
          %v427 = vmul.f32 %v417, %v417
          %v428 = vmul.f32 %v418, %v418
          %v429 = vadd.f32 %v402, %v427
          %v430 = vadd.f32 %v403, %v428
          %v431 = vmul.f32 %v412, %v417
          %v432 = vmul.f32 %v413, %v418
          %v433 = vadd.f32 %v406, %v431
          %v434 = vadd.f32 %v407, %v432
          %s435 = sadd.s32 0, 80
          %s436 = scalar_lea.vmem %s251, %s435
          %v437 = vld [vmem:[%s436] sm:$0xff]
          %v438 = vld [vmem:[%s436 + $0x8] sm:$0xff]
          %v439 = vsub.f32 %v437, %v297
          %v440 = vsub.f32 %v438, %v297
          %s441 = scalar_lea.vmem %s266, %s435
          %v442 = vld [vmem:[%s441] sm:$0xff]
          %v443 = vld [vmem:[%s441 + $0x8] sm:$0xff]
          %v444 = vsub.f32 %v442, %v298
          %v445 = vsub.f32 %v443, %v298
          %v446 = vadd.f32 %v419, %v439
          %v447 = vadd.f32 %v420, %v440
          %v448 = vadd.f32 %v421, %v444
          %v449 = vadd.f32 %v422, %v445
          %v450 = vmul.f32 %v439, %v439
          %v451 = vmul.f32 %v440, %v440
          %v452 = vadd.f32 %v425, %v450
          %v453 = vadd.f32 %v426, %v451
          %v454 = vmul.f32 %v444, %v444
          %v455 = vmul.f32 %v445, %v445
          %v456 = vadd.f32 %v429, %v454
          %v457 = vadd.f32 %v430, %v455
          %v458 = vmul.f32 %v439, %v444
          %v459 = vmul.f32 %v440, %v445
          %v460 = vadd.f32 %v433, %v458
          %v461 = vadd.f32 %v434, %v459
          %s462 = sadd.s32 0, 96
          %s463 = scalar_lea.vmem %s251, %s462
          %v464 = vld [vmem:[%s463] sm:$0xff]
          %v465 = vld [vmem:[%s463 + $0x8] sm:$0xff]
          %v466 = vsub.f32 %v464, %v297
          %v467 = vsub.f32 %v465, %v297
          %s468 = scalar_lea.vmem %s266, %s462
          %v469 = vld [vmem:[%s468] sm:$0xff]
          %v470 = vld [vmem:[%s468 + $0x8] sm:$0xff]
          %v471 = vsub.f32 %v469, %v298
          %v472 = vsub.f32 %v470, %v298
          %v473 = vadd.f32 %v446, %v466
          %v474 = vadd.f32 %v447, %v467
          %v475 = vadd.f32 %v448, %v471
          %v476 = vadd.f32 %v449, %v472
          %v477 = vmul.f32 %v466, %v466
          %v478 = vmul.f32 %v467, %v467
          %v479 = vadd.f32 %v452, %v477
          %v480 = vadd.f32 %v453, %v478
          %v481 = vmul.f32 %v471, %v471
          %v482 = vmul.f32 %v472, %v472
          %v483 = vadd.f32 %v456, %v481
          %v484 = vadd.f32 %v457, %v482
          %v485 = vmul.f32 %v466, %v471
          %v486 = vmul.f32 %v467, %v472
          %v487 = vadd.f32 %v460, %v485
          %v488 = vadd.f32 %v461, %v486
          %s489 = sadd.s32 0, 112
          %s490 = scalar_lea.vmem %s251, %s489
          %v491 = vld [vmem:[%s490] sm:$0xff]
          %v492 = vld [vmem:[%s490 + $0x8] sm:$0xff]
          %v493 = vsub.f32 %v491, %v297
          %v494 = vsub.f32 %v492, %v297
          %s495 = scalar_lea.vmem %s266, %s489
          %v496 = vld [vmem:[%s495] sm:$0xff]
          %v497 = vld [vmem:[%s495 + $0x8] sm:$0xff]
          %v498 = vsub.f32 %v496, %v298
          %v499 = vsub.f32 %v497, %v298
          %v500 = vadd.f32 %v473, %v493
          %v501 = vadd.f32 %v474, %v494
          %v502 = vadd.f32 %v475, %v498
          %v503 = vadd.f32 %v476, %v499
          %v504 = vmul.f32 %v493, %v493
          %v505 = vmul.f32 %v494, %v494
          %v506 = vadd.f32 %v479, %v504
          %v507 = vadd.f32 %v480, %v505
          %v508 = vmul.f32 %v498, %v498
          %v509 = vmul.f32 %v499, %v499
          %v510 = vadd.f32 %v483, %v508
          %v511 = vadd.f32 %v484, %v509
          %v512 = vmul.f32 %v493, %v498
          %v513 = vmul.f32 %v494, %v499
          %v514 = vadd.f32 %v487, %v512
          %v515 = vadd.f32 %v488, %v513
          %v516 = vld [vmem:[%s242] sm:$0xff]
          %v517 = vld [vmem:[%s242 + $0x8] sm:$0xff]
          %v518 = vadd.f32 %v516, %v500
          %v519 = vadd.f32 %v517, %v501
          %520 = vst [vmem:[%s242] sm:$0xff] %v518
          %521 = vst [vmem:[%s242 + $0x8] sm:$0xff] %v519
          %s522 = scalar_lea.vmem %s242, 16 [#allocation5]
          %v523 = vld [vmem:[%s522] sm:$0xff]
          %v524 = vld [vmem:[%s522 + $0x8] sm:$0xff]
          %v525 = vadd.f32 %v523, %v502
          %v526 = vadd.f32 %v524, %v503
          %527 = vst [vmem:[%s522] sm:$0xff] %v525
          %528 = vst [vmem:[%s522 + $0x8] sm:$0xff] %v526
          %s529 = scalar_lea.vmem %s242, 32 [#allocation5]
          %v530 = vld [vmem:[%s529] sm:$0xff]
          %v531 = vld [vmem:[%s529 + $0x8] sm:$0xff]
          %v532 = vadd.f32 %v530, %v506
          %v533 = vadd.f32 %v531, %v507
          %534 = vst [vmem:[%s529] sm:$0xff] %v532
          %535 = vst [vmem:[%s529 + $0x8] sm:$0xff] %v533
          %s536 = scalar_lea.vmem %s242, 48 [#allocation5]
          %v537 = vld [vmem:[%s536] sm:$0xff]
          %v538 = vld [vmem:[%s536 + $0x8] sm:$0xff]
          %v539 = vadd.f32 %v537, %v510
          %v540 = vadd.f32 %v538, %v511
          %541 = vst [vmem:[%s536] sm:$0xff] %v539
          %542 = vst [vmem:[%s536 + $0x8] sm:$0xff] %v540
          %s543 = scalar_lea.vmem %s242, 64 [#allocation5]
          %v544 = vld [vmem:[%s543] sm:$0xff]
          %v545 = vld [vmem:[%s543 + $0x8] sm:$0xff]
          %v546 = vadd.f32 %v544, %v514
          %v547 = vadd.f32 %v545, %v515
          %548 = vst [vmem:[%s543] sm:$0xff] %v546
          %549 = vst [vmem:[%s543 + $0x8] sm:$0xff] %v547
        $region44: #{tpu_custom_call.1} parent=31 // pred_fallthru
          _
        %p550 = scmp.gt.s32.totalorder %s294, 0
        %p551 = scmp.lt.s32.totalorder %s294, 128
        %p552 = pnand %p550, %p551
        %p553 = pneg %p552
        // Predicated region
        $region45: #{tpu_custom_call.1} parent=31 // pred_check
          _
        $region46: #{tpu_custom_call.1} parent=31 // pred_check_branch
          %555 = sbr.rel (%p552) target = $region48
        $region47: #{tpu_custom_call.1} parent=31 // pred_region
          %v556 = vld [vmem:[%s251] sm:$0xff]
          %v557 = vld [vmem:[%s251 + $0x8] sm:$0xff]
          %v558 = vsub.f32 %v556, %v297
          %v559 = vsub.f32 %v557, %v297
          %v560 = vld [vmem:[%s266] sm:$0xff]
          %v561 = vld [vmem:[%s266 + $0x8] sm:$0xff]
          %v562 = vsub.f32 %v560, %v298
          %v563 = vsub.f32 %v561, %v298
          %v564 = vlaneseq
          %v565 = vshrl.u32 %v564, 7
          %v566 = vadd.s32 %v565, 8
          %v567 = vstv 0
          %v568 = vadd.s32 %v567, %v565
          %v569 = vadd.s32 %v567, %v566
          %v570 = vstv %s294
          %vm571 = vcmp.lt.s32.totalorder %v568, %v570
          %vm572 = vcmp.lt.s32.totalorder %v569, %v570
          %v573 = vsel %vm571, %v558, 0.0
          %v574 = vsel %vm572, %v559, 0.0
          %v575 = vsel %vm571, %v562, 0.0
          %v576 = vsel %vm572, %v563, 0.0
          %v577 = vadd.f32 %v573, 0.0
          %v578 = vadd.f32 %v574, 0.0
          %v579 = vadd.f32 %v575, 0.0
          %v580 = vadd.f32 %v576, 0.0
          %v581 = vmul.f32 %v573, %v573
          %v582 = vmul.f32 %v574, %v574
          %v583 = vadd.f32 %v581, 0.0
          %v584 = vadd.f32 %v582, 0.0
          %v585 = vmul.f32 %v575, %v575
          %v586 = vmul.f32 %v576, %v576
          %v587 = vadd.f32 %v585, 0.0
          %v588 = vadd.f32 %v586, 0.0
          %v589 = vmul.f32 %v573, %v575
          %v590 = vmul.f32 %v574, %v576
          %v591 = vadd.f32 %v589, 0.0
          %v592 = vadd.f32 %v590, 0.0
          %s593 = sadd.s32 0, 16
          %s594 = scalar_lea.vmem %s251, %s593
          %v595 = vld [vmem:[%s594] sm:$0xff]
          %v596 = vld [vmem:[%s594 + $0x8] sm:$0xff]
          %v597 = vsub.f32 %v595, %v297
          %v598 = vsub.f32 %v596, %v297
          %s599 = scalar_lea.vmem %s266, %s593
          %v600 = vld [vmem:[%s599] sm:$0xff]
          %v601 = vld [vmem:[%s599 + $0x8] sm:$0xff]
          %v602 = vsub.f32 %v600, %v298
          %v603 = vsub.f32 %v601, %v298
          %v604 = vstv %s593
          %v605 = vadd.s32 %v604, %v565
          %v606 = vadd.s32 %v604, %v566
          %vm607 = vcmp.lt.s32.totalorder %v605, %v570
          %vm608 = vcmp.lt.s32.totalorder %v606, %v570
          %v609 = vsel %vm607, %v597, 0.0
          %v610 = vsel %vm608, %v598, 0.0
          %v611 = vsel %vm607, %v602, 0.0
          %v612 = vsel %vm608, %v603, 0.0
          %v613 = vadd.f32 %v577, %v609
          %v614 = vadd.f32 %v578, %v610
          %v615 = vadd.f32 %v579, %v611
          %v616 = vadd.f32 %v580, %v612
          %v617 = vmul.f32 %v609, %v609
          %v618 = vmul.f32 %v610, %v610
          %v619 = vadd.f32 %v583, %v617
          %v620 = vadd.f32 %v584, %v618
          %v621 = vmul.f32 %v611, %v611
          %v622 = vmul.f32 %v612, %v612
          %v623 = vadd.f32 %v587, %v621
          %v624 = vadd.f32 %v588, %v622
          %v625 = vmul.f32 %v609, %v611
          %v626 = vmul.f32 %v610, %v612
          %v627 = vadd.f32 %v591, %v625
          %v628 = vadd.f32 %v592, %v626
          %s629 = sadd.s32 0, 32
          %s630 = scalar_lea.vmem %s251, %s629
          %v631 = vld [vmem:[%s630] sm:$0xff]
          %v632 = vld [vmem:[%s630 + $0x8] sm:$0xff]
          %v633 = vsub.f32 %v631, %v297
          %v634 = vsub.f32 %v632, %v297
          %s635 = scalar_lea.vmem %s266, %s629
          %v636 = vld [vmem:[%s635] sm:$0xff]
          %v637 = vld [vmem:[%s635 + $0x8] sm:$0xff]
          %v638 = vsub.f32 %v636, %v298
          %v639 = vsub.f32 %v637, %v298
          %v640 = vstv %s629
          %v641 = vadd.s32 %v640, %v565
          %v642 = vadd.s32 %v640, %v566
          %vm643 = vcmp.lt.s32.totalorder %v641, %v570
          %vm644 = vcmp.lt.s32.totalorder %v642, %v570
          %v645 = vsel %vm643, %v633, 0.0
          %v646 = vsel %vm644, %v634, 0.0
          %v647 = vsel %vm643, %v638, 0.0
          %v648 = vsel %vm644, %v639, 0.0
          %v649 = vadd.f32 %v613, %v645
          %v650 = vadd.f32 %v614, %v646
          %v651 = vadd.f32 %v615, %v647
          %v652 = vadd.f32 %v616, %v648
          %v653 = vmul.f32 %v645, %v645
          %v654 = vmul.f32 %v646, %v646
          %v655 = vadd.f32 %v619, %v653
          %v656 = vadd.f32 %v620, %v654
          %v657 = vmul.f32 %v647, %v647
          %v658 = vmul.f32 %v648, %v648
          %v659 = vadd.f32 %v623, %v657
          %v660 = vadd.f32 %v624, %v658
          %v661 = vmul.f32 %v645, %v647
          %v662 = vmul.f32 %v646, %v648
          %v663 = vadd.f32 %v627, %v661
          %v664 = vadd.f32 %v628, %v662
          %s665 = sadd.s32 0, 48
          %s666 = scalar_lea.vmem %s251, %s665
          %v667 = vld [vmem:[%s666] sm:$0xff]
          %v668 = vld [vmem:[%s666 + $0x8] sm:$0xff]
          %v669 = vsub.f32 %v667, %v297
          %v670 = vsub.f32 %v668, %v297
          %s671 = scalar_lea.vmem %s266, %s665
          %v672 = vld [vmem:[%s671] sm:$0xff]
          %v673 = vld [vmem:[%s671 + $0x8] sm:$0xff]
          %v674 = vsub.f32 %v672, %v298
          %v675 = vsub.f32 %v673, %v298
          %v676 = vstv %s665
          %v677 = vadd.s32 %v676, %v565
          %v678 = vadd.s32 %v676, %v566
          %vm679 = vcmp.lt.s32.totalorder %v677, %v570
          %vm680 = vcmp.lt.s32.totalorder %v678, %v570
          %v681 = vsel %vm679, %v669, 0.0
          %v682 = vsel %vm680, %v670, 0.0
          %v683 = vsel %vm679, %v674, 0.0
          %v684 = vsel %vm680, %v675, 0.0
          %v685 = vadd.f32 %v649, %v681
          %v686 = vadd.f32 %v650, %v682
          %v687 = vadd.f32 %v651, %v683
          %v688 = vadd.f32 %v652, %v684
          %v689 = vmul.f32 %v681, %v681
          %v690 = vmul.f32 %v682, %v682
          %v691 = vadd.f32 %v655, %v689
          %v692 = vadd.f32 %v656, %v690
          %v693 = vmul.f32 %v683, %v683
          %v694 = vmul.f32 %v684, %v684
          %v695 = vadd.f32 %v659, %v693
          %v696 = vadd.f32 %v660, %v694
          %v697 = vmul.f32 %v681, %v683
          %v698 = vmul.f32 %v682, %v684
          %v699 = vadd.f32 %v663, %v697
          %v700 = vadd.f32 %v664, %v698
          %s701 = sadd.s32 0, 64
          %s702 = scalar_lea.vmem %s251, %s701
          %v703 = vld [vmem:[%s702] sm:$0xff]
          %v704 = vld [vmem:[%s702 + $0x8] sm:$0xff]
          %v705 = vsub.f32 %v703, %v297
          %v706 = vsub.f32 %v704, %v297
          %s707 = scalar_lea.vmem %s266, %s701
          %v708 = vld [vmem:[%s707] sm:$0xff]
          %v709 = vld [vmem:[%s707 + $0x8] sm:$0xff]
          %v710 = vsub.f32 %v708, %v298
          %v711 = vsub.f32 %v709, %v298
          %v712 = vstv %s701
          %v713 = vadd.s32 %v712, %v565
          %v714 = vadd.s32 %v712, %v566
          %vm715 = vcmp.lt.s32.totalorder %v713, %v570
          %vm716 = vcmp.lt.s32.totalorder %v714, %v570
          %v717 = vsel %vm715, %v705, 0.0
          %v718 = vsel %vm716, %v706, 0.0
          %v719 = vsel %vm715, %v710, 0.0
          %v720 = vsel %vm716, %v711, 0.0
          %v721 = vadd.f32 %v685, %v717
          %v722 = vadd.f32 %v686, %v718
          %v723 = vadd.f32 %v687, %v719
          %v724 = vadd.f32 %v688, %v720
          %v725 = vmul.f32 %v717, %v717
          %v726 = vmul.f32 %v718, %v718
          %v727 = vadd.f32 %v691, %v725
          %v728 = vadd.f32 %v692, %v726
          %v729 = vmul.f32 %v719, %v719
          %v730 = vmul.f32 %v720, %v720
          %v731 = vadd.f32 %v695, %v729
          %v732 = vadd.f32 %v696, %v730
          %v733 = vmul.f32 %v717, %v719
          %v734 = vmul.f32 %v718, %v720
          %v735 = vadd.f32 %v699, %v733
          %v736 = vadd.f32 %v700, %v734
          %s737 = sadd.s32 0, 80
          %s738 = scalar_lea.vmem %s251, %s737
          %v739 = vld [vmem:[%s738] sm:$0xff]
          %v740 = vld [vmem:[%s738 + $0x8] sm:$0xff]
          %v741 = vsub.f32 %v739, %v297
          %v742 = vsub.f32 %v740, %v297
          %s743 = scalar_lea.vmem %s266, %s737
          %v744 = vld [vmem:[%s743] sm:$0xff]
          %v745 = vld [vmem:[%s743 + $0x8] sm:$0xff]
          %v746 = vsub.f32 %v744, %v298
          %v747 = vsub.f32 %v745, %v298
          %v748 = vstv %s737
          %v749 = vadd.s32 %v748, %v565
          %v750 = vadd.s32 %v748, %v566
          %vm751 = vcmp.lt.s32.totalorder %v749, %v570
          %vm752 = vcmp.lt.s32.totalorder %v750, %v570
          %v753 = vsel %vm751, %v741, 0.0
          %v754 = vsel %vm752, %v742, 0.0
          %v755 = vsel %vm751, %v746, 0.0
          %v756 = vsel %vm752, %v747, 0.0
          %v757 = vadd.f32 %v721, %v753
          %v758 = vadd.f32 %v722, %v754
          %v759 = vadd.f32 %v723, %v755
          %v760 = vadd.f32 %v724, %v756
          %v761 = vmul.f32 %v753, %v753
          %v762 = vmul.f32 %v754, %v754
          %v763 = vadd.f32 %v727, %v761
          %v764 = vadd.f32 %v728, %v762
          %v765 = vmul.f32 %v755, %v755
          %v766 = vmul.f32 %v756, %v756
          %v767 = vadd.f32 %v731, %v765
          %v768 = vadd.f32 %v732, %v766
          %v769 = vmul.f32 %v753, %v755
          %v770 = vmul.f32 %v754, %v756
          %v771 = vadd.f32 %v735, %v769
          %v772 = vadd.f32 %v736, %v770
          %s773 = sadd.s32 0, 96
          %s774 = scalar_lea.vmem %s251, %s773
          %v775 = vld [vmem:[%s774] sm:$0xff]
          %v776 = vld [vmem:[%s774 + $0x8] sm:$0xff]
          %v777 = vsub.f32 %v775, %v297
          %v778 = vsub.f32 %v776, %v297
          %s779 = scalar_lea.vmem %s266, %s773
          %v780 = vld [vmem:[%s779] sm:$0xff]
          %v781 = vld [vmem:[%s779 + $0x8] sm:$0xff]
          %v782 = vsub.f32 %v780, %v298
          %v783 = vsub.f32 %v781, %v298
          %v784 = vstv %s773
          %v785 = vadd.s32 %v784, %v565
          %v786 = vadd.s32 %v784, %v566
          %vm787 = vcmp.lt.s32.totalorder %v785, %v570
          %vm788 = vcmp.lt.s32.totalorder %v786, %v570
          %v789 = vsel %vm787, %v777, 0.0
          %v790 = vsel %vm788, %v778, 0.0
          %v791 = vsel %vm787, %v782, 0.0
          %v792 = vsel %vm788, %v783, 0.0
          %v793 = vadd.f32 %v757, %v789
          %v794 = vadd.f32 %v758, %v790
          %v795 = vadd.f32 %v759, %v791
          %v796 = vadd.f32 %v760, %v792
          %v797 = vmul.f32 %v789, %v789
          %v798 = vmul.f32 %v790, %v790
          %v799 = vadd.f32 %v763, %v797
          %v800 = vadd.f32 %v764, %v798
          %v801 = vmul.f32 %v791, %v791
          %v802 = vmul.f32 %v792, %v792
          %v803 = vadd.f32 %v767, %v801
          %v804 = vadd.f32 %v768, %v802
          %v805 = vmul.f32 %v789, %v791
          %v806 = vmul.f32 %v790, %v792
          %v807 = vadd.f32 %v771, %v805
          %v808 = vadd.f32 %v772, %v806
          %s809 = sadd.s32 0, 112
          %s810 = scalar_lea.vmem %s251, %s809
          %v811 = vld [vmem:[%s810] sm:$0xff]
          %v812 = vld [vmem:[%s810 + $0x8] sm:$0xff]
          %v813 = vsub.f32 %v811, %v297
          %v814 = vsub.f32 %v812, %v297
          %s815 = scalar_lea.vmem %s266, %s809
          %v816 = vld [vmem:[%s815] sm:$0xff]
          %v817 = vld [vmem:[%s815 + $0x8] sm:$0xff]
          %v818 = vsub.f32 %v816, %v298
          %v819 = vsub.f32 %v817, %v298
          %v820 = vstv %s809
          %v821 = vadd.s32 %v820, %v565
          %v822 = vadd.s32 %v820, %v566
          %vm823 = vcmp.lt.s32.totalorder %v821, %v570
          %vm824 = vcmp.lt.s32.totalorder %v822, %v570
          %v825 = vsel %vm823, %v813, 0.0
          %v826 = vsel %vm824, %v814, 0.0
          %v827 = vsel %vm823, %v818, 0.0
          %v828 = vsel %vm824, %v819, 0.0
          %v829 = vadd.f32 %v793, %v825
          %v830 = vadd.f32 %v794, %v826
          %v831 = vadd.f32 %v795, %v827
          %v832 = vadd.f32 %v796, %v828
          %v833 = vmul.f32 %v825, %v825
          %v834 = vmul.f32 %v826, %v826
          %v835 = vadd.f32 %v799, %v833
          %v836 = vadd.f32 %v800, %v834
          %v837 = vmul.f32 %v827, %v827
          %v838 = vmul.f32 %v828, %v828
          %v839 = vadd.f32 %v803, %v837
          %v840 = vadd.f32 %v804, %v838
          %v841 = vmul.f32 %v825, %v827
          %v842 = vmul.f32 %v826, %v828
          %v843 = vadd.f32 %v807, %v841
          %v844 = vadd.f32 %v808, %v842
          %v845 = vld [vmem:[%s242] sm:$0xff]
          %v846 = vld [vmem:[%s242 + $0x8] sm:$0xff]
          %v847 = vadd.f32 %v845, %v829
          %v848 = vadd.f32 %v846, %v830
          %849 = vst [vmem:[%s242] sm:$0xff] %v847
          %850 = vst [vmem:[%s242 + $0x8] sm:$0xff] %v848
          %s851 = scalar_lea.vmem %s242, 16 [#allocation5]
          %v852 = vld [vmem:[%s851] sm:$0xff]
          %v853 = vld [vmem:[%s851 + $0x8] sm:$0xff]
          %v854 = vadd.f32 %v852, %v831
          %v855 = vadd.f32 %v853, %v832
          %856 = vst [vmem:[%s851] sm:$0xff] %v854
          %857 = vst [vmem:[%s851 + $0x8] sm:$0xff] %v855
          %s858 = scalar_lea.vmem %s242, 32 [#allocation5]
          %v859 = vld [vmem:[%s858] sm:$0xff]
          %v860 = vld [vmem:[%s858 + $0x8] sm:$0xff]
          %v861 = vadd.f32 %v859, %v835
          %v862 = vadd.f32 %v860, %v836
          %863 = vst [vmem:[%s858] sm:$0xff] %v861
          %864 = vst [vmem:[%s858 + $0x8] sm:$0xff] %v862
          %s865 = scalar_lea.vmem %s242, 48 [#allocation5]
          %v866 = vld [vmem:[%s865] sm:$0xff]
          %v867 = vld [vmem:[%s865 + $0x8] sm:$0xff]
          %v868 = vadd.f32 %v866, %v839
          %v869 = vadd.f32 %v867, %v840
          %870 = vst [vmem:[%s865] sm:$0xff] %v868
          %871 = vst [vmem:[%s865 + $0x8] sm:$0xff] %v869
          %s872 = scalar_lea.vmem %s242, 64 [#allocation5]
          %v873 = vld [vmem:[%s872] sm:$0xff]
          %v874 = vld [vmem:[%s872 + $0x8] sm:$0xff]
          %v875 = vadd.f32 %v873, %v843
          %v876 = vadd.f32 %v874, %v844
          %877 = vst [vmem:[%s872] sm:$0xff] %v875
          %878 = vst [vmem:[%s872 + $0x8] sm:$0xff] %v876
        $region48: #{tpu_custom_call.1} parent=31 // pred_fallthru
          _
        %s879 = sand.u32 %s123, 1
        %s880 = scalar_lea.sflag [#allocation3], %s879
        %s881 = sand.u32 %s123, 1
        %s882 = smul.addr %s881, 80
        %s883 = scalar_lea.vmem [#allocation5], %s882
        // Predicated region
        $region49: #{tpu_custom_call.1} parent=31 // pred_check
          %p884 = pneg %p133
        $region50: #{tpu_custom_call.1} parent=31 // pred_check_branch
          %886 = sbr.rel (%p884) target = $region52
        $region51: #{tpu_custom_call.1} parent=31 // pred_region
          %s887 = smul.u32 5, %s22
          %s889 = ssub.s32 1280, 1280
          %890 = vsyncadd %s880, %s889
          %s891 = smul.addr %s887, 2
          %s892 = smul.addr %s891, 128
          %s893 = scalar_lea.hbm %s3, %s892
          %s894 = sshll.u32 %s883, 4
          %s895 = int_to_ptr.vmem [resolvable:$true] %s894
          %900 = dma.vmem_to_hbm [thread:$0]  %s895, 1280, %s893, %s880, 128, 128, 8
        $region52: #{tpu_custom_call.1} parent=31 // pred_fallthru
          _
      $region32: #{tpu_custom_call.1} parent=5 // pred_fallthru
        _
      %p901 = scmp.le.s32.totalorder 2, %s13
      // Predicated region
      $region53: #{tpu_custom_call.1} parent=5 // pred_check
        %p902 = pneg %p901
      $region54: #{tpu_custom_call.1} parent=5 // pred_check_branch
        %904 = sbr.rel (%p902) target = $region56
      $region55: #{tpu_custom_call.1} parent=5 // pred_region
        %s905 = ssub.s32 %s13, 2
        // Predicated region
        $region57: #{tpu_custom_call.1} parent=55 // pred_check
          %p906 = pneg %p139
        $region58: #{tpu_custom_call.1} parent=55 // pred_check_branch
          %908 = sbr.rel (%p906) target = $region60
        $region59: #{tpu_custom_call.1} parent=55 // pred_region
          %s909 = sand.u32 %s124, 1
          %s910 = scalar_lea.sflag [#allocation3], %s909
          %s911 = sand.u32 %s124, 1
          %s912 = smul.addr %s911, 80
          %s913 = scalar_lea.vmem [#allocation5], %s912
          %914 = dma.done %s910, 1280
        $region60: #{tpu_custom_call.1} parent=55 // pred_fallthru
          _
      $region56: #{tpu_custom_call.1} parent=5 // pred_fallthru
        _
    $region6: #{tpu_custom_call.1} parent=1 // loop_footer
      %s17 = sadd.s32 1, %s13
    $region7: #{tpu_custom_call.1} parent=1 // loop_footer_branch
      %12 = sbr.rel target = $region3
    $region8: #{tpu_custom_call.1} parent=1 // loop_exit
      _
    %915 = vsyncpa [#allocation3], 1
    %s916 = scalar_lea.sflag [#allocation3], 1
    %917 = vsyncpa %s916, 1
    %918 = vsyncpa [#allocation4], 1
    %s919 = scalar_lea.sflag [#allocation4], 1
    %920 = vsyncpa %s919, 1

</llo_original>
